<compile_context>
chip_gen: v7x
topology: tpu7x:2x2x1
jax: 0.10.0
libtpu: 0.0.40
codegen_flags: <defaults>
</compile_context>

<pallas_src>
import functools

import jax
import jax.numpy as jnp
from jax.experimental import pallas as pl
from jax.experimental.pallas import tpu as pltpu


def _rnn_kernel(x_ref, wi_ref, wh_ref, b_ref, h0_ref, H_ref,
                xi_scratch, h_scratch, *, n_chunks, unroll):
    # grid = (batch_shard [parallel], time_chunk + 1 [arbitrary / sequential])
    c = pl.program_id(1)

    t_chunk, b_tile, d_in_pad = x_ref.shape
    d_lat_pad = H_ref.shape[-1]

    # Double buffer bookkeeping (xi_scratch holds 2 chunks back to back).
    slot_w = c % 2            # where chunk c's projection goes
    slot_r = 1 - slot_w       # where chunk c-1's projection lives
    base_w = slot_w * t_chunk
    base_r = slot_r * t_chunk

    # ---- per-batch-shard init of the carried hidden state -----------------
    @pl.when(c == 0)
    def _():
        h_scratch[...] = h0_ref[...]

    # ---- stage 1: input projection for chunk c (skewed one step ahead) ----
    # One big MXU matmul for the whole chunk; it touches only slot_w of the
    # scratch, so it is independent of the recurrence below and can be hidden
    # under it.  Padded tail timesteps are zero rows -> exact.
    @pl.when(c < n_chunks)
    def _():
        x2d = x_ref[...].reshape(t_chunk * b_tile, d_in_pad)
        xi = jnp.dot(x2d, wi_ref[...], preferred_element_type=jnp.float32)
        xi = xi + b_ref[...]                       # combined bias (b_i + b_h)
        xi_scratch[pl.ds(base_w, t_chunk)] = xi.reshape(
            t_chunk, b_tile, d_lat_pad)

    # ---- stage 2: serial recurrence for chunk c-1 --------------------------
    # Single lane-dense write per H row (the final tanh result).
    @pl.when(c > 0)
    def _():
        def step(t, h):
            # NOTE: wh_ref[...] read inside the body (not hoisted across the
            # whole unrolled region) to keep vreg live ranges short.
            pre = xi_scratch[base_r + t] + jnp.dot(
                h.astype(wh_ref.dtype), wh_ref[...],
                preferred_element_type=jnp.float32)
            h_new = jnp.tanh(pre)
            H_ref[t] = h_new
            return h_new

        h_final = jax.lax.fori_loop(0, t_chunk, step, h_scratch[...],
                                    unroll=unroll)
        h_scratch[...] = h_final   # spill carried state once per chunk


def _round_up(x, m):
    return ((x + m - 1) // m) * m


def rnn_forward(X, h0, W_i, b_i, W_h, b_h, *,
                t_chunk=None, use_bf16=False, batch_tile=None):
    """X: (T, B, D_in), h0: (B, D_lat).
    W_i: (D_in, D_lat), W_h: (D_lat, D_lat) (pre-transposed vs nn.Linear)."""
    T, B, D_in = X.shape
    D_lat = h0.shape[1]

    f32 = jnp.float32
    compute_dtype = jnp.bfloat16 if use_bf16 else jnp.float32

    # Vreg-aligned padding.  Batch padded to x16 so the in-kernel
    # (t_chunk, B, D) -> (t_chunk*B, D) merge is layout preserving for both
    # f32 (x8 sublanes) and packed bf16 (x16 sublanes).  Zero padding is
    # exact: padded W/b columns are zero so padded hidden units stay 0.
    B_pad = _round_up(max(B, 16), 16)
    D_in_pad = _round_up(max(D_in, 128), 128)
    D_lat_pad = _round_up(max(D_lat, 128), 128)

    # Batch-shard axis: lets v7x's 2 TensorCores run independent recurrences.
    if batch_tile is None:
        batch_tile = B_pad // 2 if (B_pad % 32 == 0) else B_pad
    assert B_pad % batch_tile == 0 and batch_tile % 16 == 0
    n_bshards = B_pad // batch_tile

    # ---- VMEM-budget-derived chunk size & vmem limit -----------------------
    try:
        vmem_cap = int(pltpu.get_tpu_info().vmem_capacity_bytes)
    except Exception:
        vmem_cap = 64 * 1024 * 1024        # conservative: v7x per-TC VMEM

    x_bytes = 2 if use_bf16 else 4
    w_bytes = 2 if use_bf16 else 4
    # chunk-independent residents (weights/bias/h0 assumed double-buffered)
    fixed = 2 * (D_in_pad + D_lat_pad) * D_lat_pad * w_bytes
    fixed += 2 * (D_lat_pad * 4 + batch_tile * D_lat_pad * 4)
    fixed += batch_tile * D_lat_pad * 4                      # h_scratch
    # per-timestep cost: X block (2 bufs) + H block (2 bufs) + xi scratch (2)
    per_t = batch_tile * (2 * D_in_pad * x_bytes + 4 * D_lat_pad * 4)

    if t_chunk is None:
        budget = int(0.6 * vmem_cap) - fixed
        t_chunk = int(max(1, min(T, 512, budget // per_t)))
    T_pad = _round_up(T, t_chunk)
    n_chunks = T_pad // t_chunk

    footprint = fixed + t_chunk * per_t
    vmem_limit = int(min(max(footprint + 8 * 1024 * 1024, 32 * 1024 * 1024),
                         int(0.9 * vmem_cap)))

    # ---- padded operands ---------------------------------------------------
    Xp = jnp.zeros((T_pad, B_pad, D_in_pad), compute_dtype)
    Xp = Xp.at[:T, :B, :D_in].set(X.astype(compute_dtype))
    h0p = jnp.zeros((B_pad, D_lat_pad), f32).at[:B, :D_lat].set(h0.astype(f32))
    Wip = jnp.zeros((D_in_pad, D_lat_pad), compute_dtype)
    Wip = Wip.at[:D_in, :D_lat].set(W_i.astype(compute_dtype))
    Whp = jnp.zeros((D_lat_pad, D_lat_pad), compute_dtype)
    Whp = Whp.at[:D_lat, :D_lat].set(W_h.astype(compute_dtype))
    bp = jnp.zeros((1, D_lat_pad), f32).at[0, :D_lat].set((b_i + b_h).astype(f32))

    kernel = functools.partial(_rnn_kernel, n_chunks=n_chunks,
                               unroll=int(min(t_chunk, 8)))

    H_pad = pl.pallas_call(
        kernel,
        out_shape=jax.ShapeDtypeStruct((T_pad, B_pad, D_lat_pad), f32),
        grid_spec=pltpu.PrefetchScalarGridSpec(
            num_scalar_prefetch=0,
            grid=(n_bshards, n_chunks + 1),
            in_specs=[
                # X chunk c arrives at grid step c (skew handled in-kernel);
                # the clamp keeps the final projection-less step in range and
                # revisit detection avoids a redundant DMA there.
                pl.BlockSpec((t_chunk, batch_tile, D_in_pad),
                             lambda b, c: (jnp.minimum(c, n_chunks - 1), b, 0)),
                pl.BlockSpec((D_in_pad, D_lat_pad), lambda b, c: (0, 0)),   # W_i
                pl.BlockSpec((D_lat_pad, D_lat_pad), lambda b, c: (0, 0)),  # W_h
                pl.BlockSpec((1, D_lat_pad), lambda b, c: (0, 0)),          # b_i+b_h
                pl.BlockSpec((batch_tile, D_lat_pad), lambda b, c: (b, 0)), # h0
            ],
            # Output block is one chunk behind the grid step (skew).
            out_specs=pl.BlockSpec(
                (t_chunk, batch_tile, D_lat_pad),
                lambda b, c: (jnp.maximum(c - 1, 0), b, 0)),
            scratch_shapes=[
                pltpu.VMEM((2 * t_chunk, batch_tile, D_lat_pad), f32),  # xi (2 slots)
                pltpu.VMEM((batch_tile, D_lat_pad), f32),               # carried h
            ],
        ),
        compiler_params=pltpu.CompilerParams(
            dimension_semantics=("parallel", "arbitrary"),
            vmem_limit_bytes=vmem_limit,
        ),
    )(Xp, Wip, Whp, bp, h0p)

    return H_pad[:T, :B, :D_lat]


def _reference_forward(X, h0, W_i, b_i, W_h, b_h):
    def step(h, x):
        h_new = jnp.tanh(x @ W_i + b_i + h @ W_h + b_h)
        return h_new, h_new
    _, H = jax.lax.scan(step, h0, X)
    return H


if __name__ == "__main__":
    key = jax.random.PRNGKey(0)
    k_x, k_h, k_wi, k_bi, k_wh, k_bh, k_x2, k_h2 = jax.random.split(key, 8)

    # Deterministic "Linear" init, stored pre-transposed as (in, out).
    def linear_init(kw, kb, fan_in, fan_out):
        bound = 1.0 / jnp.sqrt(fan_in)
        W = jax.random.uniform(kw, (fan_in, fan_out), minval=-bound,
                               maxval=bound, dtype=jnp.float32)
        b = jax.random.uniform(kb, (fan_out,), minval=-bound, maxval=bound,
                               dtype=jnp.float32)
        return W, b

    # --- test 1: module-sized problem, f32 path, tight tolerance -----------
    T, B, dim_input, dim_latent = 8, 4, 16, 32
    # dim_output / w_d exist in the module but are unused in forward.
    X = jax.random.normal(k_x, (T, B, dim_input), dtype=jnp.float32)
    h0 = jax.random.normal(k_h, (B, dim_latent), dtype=jnp.float32)
    W_i, b_i = linear_init(k_wi, k_bi, dim_input, dim_latent)
    W_h, b_h = linear_init(k_wh, k_bh, dim_latent, dim_latent)

    H_ref = _reference_forward(X, h0, W_i, b_i, W_h, b_h)

    H = rnn_forward(X, h0, W_i, b_i, W_h, b_h)
    jax.block_until_ready(H)
    assert H.shape == (T, B, dim_latent)
    assert jnp.allclose(H, H_ref, atol=1e-5, rtol=1e-5), "f32 mismatch"

    # --- test 2: bf16 MXU operands (looser tolerance), forced multi-chunk --
    H_bf16 = rnn_forward(X, h0, W_i, b_i, W_h, b_h, t_chunk=3, use_bf16=True)
    jax.block_until_ready(H_bf16)
    assert jnp.allclose(H_bf16, H_ref, atol=5e-2, rtol=5e-2), "bf16 mismatch"

    # --- test 3: multi-chunk + 2 batch shards (exercises skew & parallel axis)
    T3, B3 = 5, 20
    X3 = jax.random.normal(k_x2, (T3, B3, dim_input), dtype=jnp.float32)
    h03 = jax.random.normal(k_h2, (B3, dim_latent), dtype=jnp.float32)
    H3 = rnn_forward(X3, h03, W_i, b_i, W_h, b_h, t_chunk=2)
    jax.block_until_ready(H3)
    H3_ref = _reference_forward(X3, h03, W_i, b_i, W_h, b_h)
    assert jnp.allclose(H3, H3_ref, atol=1e-5, rtol=1e-5), "multi-shard mismatch"

    print("KERNEL_OK")
</pallas_src>

<mosaic_0001>
module attributes {stable_mosaic.version = 11 : i64} {
  func.func @_rnn_kernel(%arg0: i32, %arg1: i32, %arg2: memref<8x16x128xf32, #tpu.memory_space<vmem>>, %arg3: memref<128x128xf32, #tpu.memory_space<vmem>>, %arg4: memref<128x128xf32, #tpu.memory_space<vmem>>, %arg5: memref<1x128xf32, #tpu.memory_space<vmem>>, %arg6: memref<16x128xf32, #tpu.memory_space<vmem>>, %arg7: memref<8x16x128xf32, #tpu.memory_space<vmem>>, %arg8: memref<16x16x128xf32, #tpu.memory_space<vmem>>, %arg9: memref<16x128xf32, #tpu.memory_space<vmem>>) attributes {dimension_semantics = [#tpu.dimension_semantics<parallel>, #tpu.dimension_semantics<arbitrary>], iteration_bounds = array<i64: 1, 2>, scalar_prefetch = 0 : i64, scratch_operands = 2 : i64, tpu.core_type = #tpu.core_type<tc>, window_params = [{transform_indices = @transform_0, window_bounds = array<i64: 8, 16, 128>}, {pipeline_mode = #tpu.pipeline_mode<synchronous>, transform_indices = @transform_1, window_bounds = array<i64: 128, 128>}, {pipeline_mode = #tpu.pipeline_mode<synchronous>, transform_indices = @transform_2, window_bounds = array<i64: 128, 128>}, {pipeline_mode = #tpu.pipeline_mode<synchronous>, transform_indices = @transform_3, window_bounds = array<i64: 1, 128>}, {transform_indices = @transform_4, window_bounds = array<i64: 16, 128>}, {transform_indices = @transform_5, window_bounds = array<i64: 8, 16, 128>}]} {
    %c2_i32 = arith.constant 2 : i32
    %c0_i32 = arith.constant 0 : i32
    %0 = arith.cmpi eq, %c2_i32, %c0_i32 : i32
    %c1_i32 = arith.constant 1 : i32
    %1 = arith.select %0, %c1_i32, %c2_i32 : i32
    %2 = arith.remsi %arg1, %1 : i32
    %c0_i32_0 = arith.constant 0 : i32
    %3 = arith.cmpi ne, %2, %c0_i32_0 : i32
    %c0_i32_1 = arith.constant 0 : i32
    %4 = arith.cmpi slt, %2, %c0_i32_1 : i32
    %c0_i32_2 = arith.constant 0 : i32
    %5 = arith.cmpi slt, %1, %c0_i32_2 : i32
    %6 = arith.xori %4, %5 : i1
    %7 = arith.andi %6, %3 : i1
    %8 = arith.addi %2, %1 : i32
    %9 = arith.select %7, %8, %2 : i32
    %c1_i32_3 = arith.constant 1 : i32
    %10 = arith.subi %c1_i32_3, %9 : i32
    %c8_i32 = arith.constant 8 : i32
    %11 = arith.muli %9, %c8_i32 : i32
    %c8_i32_4 = arith.constant 8 : i32
    %12 = arith.muli %10, %c8_i32_4 : i32
    %c0_i32_5 = arith.constant 0 : i32
    %13 = arith.cmpi eq, %arg1, %c0_i32_5 : i32
    %14 = arith.extui %13 : i1 to i32
    %c0_i32_6 = arith.constant 0 : i32
    %15 = arith.cmpi ne, %14, %c0_i32_6 : i32
    scf.if %15 {
      %c0 = arith.constant 0 : index
      %c0_11 = arith.constant 0 : index
      %22 = vector.load %arg6[%c0, %c0_11] : memref<16x128xf32, #tpu.memory_space<vmem>>, vector<16x128xf32>
      %c0_12 = arith.constant 0 : index
      %c0_13 = arith.constant 0 : index
      %23 = vector.load %arg9[%c0_12, %c0_13] : memref<16x128xf32, #tpu.memory_space<vmem>>, vector<16x128xf32>
      tpu.vector_store %arg9[%c0_12, %c0_13], %22 {strides = array<i32>} : memref<16x128xf32, #tpu.memory_space<vmem>>, vector<16x128xf32>,
    } else {
    }
    %c1_i32_7 = arith.constant 1 : i32
    %16 = arith.cmpi slt, %arg1, %c1_i32_7 : i32
    %17 = arith.extui %16 : i1 to i32
    %c0_i32_8 = arith.constant 0 : i32
    %18 = arith.cmpi ne, %17, %c0_i32_8 : i32
    scf.if %18 {
      %c0 = arith.constant 0 : index
      %c0_11 = arith.constant 0 : index
      %c0_12 = arith.constant 0 : index
      %22 = vector.load %arg2[%c0, %c0_11, %c0_12] : memref<8x16x128xf32, #tpu.memory_space<vmem>>, vector<8x16x128xf32>
      %23 = vector.shape_cast %22 : vector<8x16x128xf32> to vector<128x128xf32>
      %c0_13 = arith.constant 0 : index
      %c0_14 = arith.constant 0 : index
      %24 = vector.load %arg3[%c0_13, %c0_14] : memref<128x128xf32, #tpu.memory_space<vmem>>, vector<128x128xf32>
      %cst = arith.constant dense<0.000000e+00> : vector<128x128xf32>
      %25 = tpu.matmul %23, %24, %cst {dimension_numbers = #tpu.dot_dimension_numbers<[1], [0], [0], [1], [0, 0, 1, 1], [], []>} : vector<128x128xf32>, vector<128x128xf32>, vector<128x128xf32> -> vector<128x128xf32>
      %c0_15 = arith.constant 0 : index
      %c0_16 = arith.constant 0 : index
      %26 = vector.load %arg5[%c0_15, %c0_16] : memref<1x128xf32, #tpu.memory_space<vmem>>, vector<1x128xf32>
      %27 = vector.broadcast %26 : vector<1x128xf32> to vector<128x128xf32>
      %28 = arith.addf %25, %27 : vector<128x128xf32>
      %29 = vector.shape_cast %28 : vector<128x128xf32> to vector<8x16x128xf32>
      %30 = arith.index_cast %11 : i32 to index
      %c0_17 = arith.constant 0 : index
      %c0_18 = arith.constant 0 : index
      %31 = vector.load %arg8[%30, %c0_17, %c0_18] : memref<16x16x128xf32, #tpu.memory_space<vmem>>, vector<8x16x128xf32>
      tpu.vector_store %arg8[%30, %c0_17, %c0_18], %29 {strides = array<i32>} : memref<16x16x128xf32, #tpu.memory_space<vmem>>, vector<8x16x128xf32>,
    } else {
    }
    %c0_i32_9 = arith.constant 0 : i32
    %19 = arith.cmpi sgt, %arg1, %c0_i32_9 : i32
    %20 = arith.extui %19 : i1 to i32
    %c0_i32_10 = arith.constant 0 : i32
    %21 = arith.cmpi ne, %20, %c0_i32_10 : i32
    scf.if %21 {
      %c0 = arith.constant 0 : index
      %c0_11 = arith.constant 0 : index
      %22 = vector.load %arg9[%c0, %c0_11] : memref<16x128xf32, #tpu.memory_space<vmem>>, vector<16x128xf32>
      %c0_i32_12 = arith.constant 0 : i32
      %23 = arith.addi %12, %c0_i32_12 : i32
      %24 = arith.index_cast %23 : i32 to index
      %c0_13 = arith.constant 0 : index
      %c0_14 = arith.constant 0 : index
      %25 = vector.load %arg8[%24, %c0_13, %c0_14] : memref<16x16x128xf32, #tpu.memory_space<vmem>>, vector<1x16x128xf32>
      %26 = vector.shape_cast %25 : vector<1x16x128xf32> to vector<16x128xf32>
      %c0_15 = arith.constant 0 : index
      %c0_16 = arith.constant 0 : index
      %27 = vector.load %arg4[%c0_15, %c0_16] : memref<128x128xf32, #tpu.memory_space<vmem>>, vector<128x128xf32>
      %cst = arith.constant dense<0.000000e+00> : vector<16x128xf32>
      %28 = tpu.matmul %22, %27, %cst {dimension_numbers = #tpu.dot_dimension_numbers<[1], [0], [0], [1], [0, 0, 1, 1], [], []>} : vector<16x128xf32>, vector<128x128xf32>, vector<16x128xf32> -> vector<16x128xf32>
      %29 = arith.addf %26, %28 : vector<16x128xf32>
      %30 = math.tanh %29 : vector<16x128xf32>
      %31 = arith.index_cast %c0_i32_12 : i32 to index
      %c0_17 = arith.constant 0 : index
      %c0_18 = arith.constant 0 : index
      %32 = vector.load %arg7[%31, %c0_17, %c0_18] : memref<8x16x128xf32, #tpu.memory_space<vmem>>, vector<1x16x128xf32>
      %33 = vector.shape_cast %32 : vector<1x16x128xf32> to vector<16x128xf32>
      %34 = vector.shape_cast %30 : vector<16x128xf32> to vector<1x16x128xf32>
      tpu.vector_store %arg7[%31, %c0_17, %c0_18], %34 {strides = array<i32>} : memref<8x16x128xf32, #tpu.memory_space<vmem>>, vector<1x16x128xf32>,
      %c1_i32_19 = arith.constant 1 : i32
      %35 = arith.addi %12, %c1_i32_19 : i32
      %36 = arith.index_cast %35 : i32 to index
      %c0_20 = arith.constant 0 : index
      %c0_21 = arith.constant 0 : index
      %37 = vector.load %arg8[%36, %c0_20, %c0_21] : memref<16x16x128xf32, #tpu.memory_space<vmem>>, vector<1x16x128xf32>
      %38 = vector.shape_cast %37 : vector<1x16x128xf32> to vector<16x128xf32>
      %c0_22 = arith.constant 0 : index
      %c0_23 = arith.constant 0 : index
      %39 = vector.load %arg4[%c0_22, %c0_23] : memref<128x128xf32, #tpu.memory_space<vmem>>, vector<128x128xf32>
      %cst_24 = arith.constant dense<0.000000e+00> : vector<16x128xf32>
      %40 = tpu.matmul %30, %39, %cst_24 {dimension_numbers = #tpu.dot_dimension_numbers<[1], [0], [0], [1], [0, 0, 1, 1], [], []>} : vector<16x128xf32>, vector<128x128xf32>, vector<16x128xf32> -> vector<16x128xf32>
      %41 = arith.addf %38, %40 : vector<16x128xf32>
      %42 = math.tanh %41 : vector<16x128xf32>
      %43 = arith.index_cast %c1_i32_19 : i32 to index
      %c0_25 = arith.constant 0 : index
      %c0_26 = arith.constant 0 : index
      %44 = vector.load %arg7[%43, %c0_25, %c0_26] : memref<8x16x128xf32, #tpu.memory_space<vmem>>, vector<1x16x128xf32>
      %45 = vector.shape_cast %44 : vector<1x16x128xf32> to vector<16x128xf32>
      %46 = vector.shape_cast %42 : vector<16x128xf32> to vector<1x16x128xf32>
      tpu.vector_store %arg7[%43, %c0_25, %c0_26], %46 {strides = array<i32>} : memref<8x16x128xf32, #tpu.memory_space<vmem>>, vector<1x16x128xf32>,
      %c2_i32_27 = arith.constant 2 : i32
      %47 = arith.addi %12, %c2_i32_27 : i32
      %48 = arith.index_cast %47 : i32 to index
      %c0_28 = arith.constant 0 : index
      %c0_29 = arith.constant 0 : index
      %49 = vector.load %arg8[%48, %c0_28, %c0_29] : memref<16x16x128xf32, #tpu.memory_space<vmem>>, vector<1x16x128xf32>
      %50 = vector.shape_cast %49 : vector<1x16x128xf32> to vector<16x128xf32>
      %c0_30 = arith.constant 0 : index
      %c0_31 = arith.constant 0 : index
      %51 = vector.load %arg4[%c0_30, %c0_31] : memref<128x128xf32, #tpu.memory_space<vmem>>, vector<128x128xf32>
      %cst_32 = arith.constant dense<0.000000e+00> : vector<16x128xf32>
      %52 = tpu.matmul %42, %51, %cst_32 {dimension_numbers = #tpu.dot_dimension_numbers<[1], [0], [0], [1], [0, 0, 1, 1], [], []>} : vector<16x128xf32>, vector<128x128xf32>, vector<16x128xf32> -> vector<16x128xf32>
      %53 = arith.addf %50, %52 : vector<16x128xf32>
      %54 = math.tanh %53 : vector<16x128xf32>
      %55 = arith.index_cast %c2_i32_27 : i32 to index
      %c0_33 = arith.constant 0 : index
      %c0_34 = arith.constant 0 : index
      %56 = vector.load %arg7[%55, %c0_33, %c0_34] : memref<8x16x128xf32, #tpu.memory_space<vmem>>, vector<1x16x128xf32>
      %57 = vector.shape_cast %56 : vector<1x16x128xf32> to vector<16x128xf32>
      %58 = vector.shape_cast %54 : vector<16x128xf32> to vector<1x16x128xf32>
      tpu.vector_store %arg7[%55, %c0_33, %c0_34], %58 {strides = array<i32>} : memref<8x16x128xf32, #tpu.memory_space<vmem>>, vector<1x16x128xf32>,
      %c3_i32 = arith.constant 3 : i32
      %59 = arith.addi %12, %c3_i32 : i32
      %60 = arith.index_cast %59 : i32 to index
      %c0_35 = arith.constant 0 : index
      %c0_36 = arith.constant 0 : index
      %61 = vector.load %arg8[%60, %c0_35, %c0_36] : memref<16x16x128xf32, #tpu.memory_space<vmem>>, vector<1x16x128xf32>
      %62 = vector.shape_cast %61 : vector<1x16x128xf32> to vector<16x128xf32>
      %c0_37 = arith.constant 0 : index
      %c0_38 = arith.constant 0 : index
      %63 = vector.load %arg4[%c0_37, %c0_38] : memref<128x128xf32, #tpu.memory_space<vmem>>, vector<128x128xf32>
      %cst_39 = arith.constant dense<0.000000e+00> : vector<16x128xf32>
      %64 = tpu.matmul %54, %63, %cst_39 {dimension_numbers = #tpu.dot_dimension_numbers<[1], [0], [0], [1], [0, 0, 1, 1], [], []>} : vector<16x128xf32>, vector<128x128xf32>, vector<16x128xf32> -> vector<16x128xf32>
      %65 = arith.addf %62, %64 : vector<16x128xf32>
      %66 = math.tanh %65 : vector<16x128xf32>
      %67 = arith.index_cast %c3_i32 : i32 to index
      %c0_40 = arith.constant 0 : index
      %c0_41 = arith.constant 0 : index
      %68 = vector.load %arg7[%67, %c0_40, %c0_41] : memref<8x16x128xf32, #tpu.memory_space<vmem>>, vector<1x16x128xf32>
      %69 = vector.shape_cast %68 : vector<1x16x128xf32> to vector<16x128xf32>
      %70 = vector.shape_cast %66 : vector<16x128xf32> to vector<1x16x128xf32>
      tpu.vector_store %arg7[%67, %c0_40, %c0_41], %70 {strides = array<i32>} : memref<8x16x128xf32, #tpu.memory_space<vmem>>, vector<1x16x128xf32>,
      %c4_i32 = arith.constant 4 : i32
      %71 = arith.addi %12, %c4_i32 : i32
      %72 = arith.index_cast %71 : i32 to index
      %c0_42 = arith.constant 0 : index
      %c0_43 = arith.constant 0 : index
      %73 = vector.load %arg8[%72, %c0_42, %c0_43] : memref<16x16x128xf32, #tpu.memory_space<vmem>>, vector<1x16x128xf32>
      %74 = vector.shape_cast %73 : vector<1x16x128xf32> to vector<16x128xf32>
      %c0_44 = arith.constant 0 : index
      %c0_45 = arith.constant 0 : index
      %75 = vector.load %arg4[%c0_44, %c0_45] : memref<128x128xf32, #tpu.memory_space<vmem>>, vector<128x128xf32>
      %cst_46 = arith.constant dense<0.000000e+00> : vector<16x128xf32>
      %76 = tpu.matmul %66, %75, %cst_46 {dimension_numbers = #tpu.dot_dimension_numbers<[1], [0], [0], [1], [0, 0, 1, 1], [], []>} : vector<16x128xf32>, vector<128x128xf32>, vector<16x128xf32> -> vector<16x128xf32>
      %77 = arith.addf %74, %76 : vector<16x128xf32>
      %78 = math.tanh %77 : vector<16x128xf32>
      %79 = arith.index_cast %c4_i32 : i32 to index
      %c0_47 = arith.constant 0 : index
      %c0_48 = arith.constant 0 : index
      %80 = vector.load %arg7[%79, %c0_47, %c0_48] : memref<8x16x128xf32, #tpu.memory_space<vmem>>, vector<1x16x128xf32>
      %81 = vector.shape_cast %80 : vector<1x16x128xf32> to vector<16x128xf32>
      %82 = vector.shape_cast %78 : vector<16x128xf32> to vector<1x16x128xf32>
      tpu.vector_store %arg7[%79, %c0_47, %c0_48], %82 {strides = array<i32>} : memref<8x16x128xf32, #tpu.memory_space<vmem>>, vector<1x16x128xf32>,
      %c5_i32 = arith.constant 5 : i32
      %83 = arith.addi %12, %c5_i32 : i32
      %84 = arith.index_cast %83 : i32 to index
      %c0_49 = arith.constant 0 : index
      %c0_50 = arith.constant 0 : index
      %85 = vector.load %arg8[%84, %c0_49, %c0_50] : memref<16x16x128xf32, #tpu.memory_space<vmem>>, vector<1x16x128xf32>
      %86 = vector.shape_cast %85 : vector<1x16x128xf32> to vector<16x128xf32>
      %c0_51 = arith.constant 0 : index
      %c0_52 = arith.constant 0 : index
      %87 = vector.load %arg4[%c0_51, %c0_52] : memref<128x128xf32, #tpu.memory_space<vmem>>, vector<128x128xf32>
      %cst_53 = arith.constant dense<0.000000e+00> : vector<16x128xf32>
      %88 = tpu.matmul %78, %87, %cst_53 {dimension_numbers = #tpu.dot_dimension_numbers<[1], [0], [0], [1], [0, 0, 1, 1], [], []>} : vector<16x128xf32>, vector<128x128xf32>, vector<16x128xf32> -> vector<16x128xf32>
      %89 = arith.addf %86, %88 : vector<16x128xf32>
      %90 = math.tanh %89 : vector<16x128xf32>
      %91 = arith.index_cast %c5_i32 : i32 to index
      %c0_54 = arith.constant 0 : index
      %c0_55 = arith.constant 0 : index
      %92 = vector.load %arg7[%91, %c0_54, %c0_55] : memref<8x16x128xf32, #tpu.memory_space<vmem>>, vector<1x16x128xf32>
      %93 = vector.shape_cast %92 : vector<1x16x128xf32> to vector<16x128xf32>
      %94 = vector.shape_cast %90 : vector<16x128xf32> to vector<1x16x128xf32>
      tpu.vector_store %arg7[%91, %c0_54, %c0_55], %94 {strides = array<i32>} : memref<8x16x128xf32, #tpu.memory_space<vmem>>, vector<1x16x128xf32>,
      %c6_i32 = arith.constant 6 : i32
      %95 = arith.addi %12, %c6_i32 : i32
      %96 = arith.index_cast %95 : i32 to index
      %c0_56 = arith.constant 0 : index
      %c0_57 = arith.constant 0 : index
      %97 = vector.load %arg8[%96, %c0_56, %c0_57] : memref<16x16x128xf32, #tpu.memory_space<vmem>>, vector<1x16x128xf32>
      %98 = vector.shape_cast %97 : vector<1x16x128xf32> to vector<16x128xf32>
      %c0_58 = arith.constant 0 : index
      %c0_59 = arith.constant 0 : index
      %99 = vector.load %arg4[%c0_58, %c0_59] : memref<128x128xf32, #tpu.memory_space<vmem>>, vector<128x128xf32>
      %cst_60 = arith.constant dense<0.000000e+00> : vector<16x128xf32>
      %100 = tpu.matmul %90, %99, %cst_60 {dimension_numbers = #tpu.dot_dimension_numbers<[1], [0], [0], [1], [0, 0, 1, 1], [], []>} : vector<16x128xf32>, vector<128x128xf32>, vector<16x128xf32> -> vector<16x128xf32>
      %101 = arith.addf %98, %100 : vector<16x128xf32>
      %102 = math.tanh %101 : vector<16x128xf32>
      %103 = arith.index_cast %c6_i32 : i32 to index
      %c0_61 = arith.constant 0 : index
      %c0_62 = arith.constant 0 : index
      %104 = vector.load %arg7[%103, %c0_61, %c0_62] : memref<8x16x128xf32, #tpu.memory_space<vmem>>, vector<1x16x128xf32>
      %105 = vector.shape_cast %104 : vector<1x16x128xf32> to vector<16x128xf32>
      %106 = vector.shape_cast %102 : vector<16x128xf32> to vector<1x16x128xf32>
      tpu.vector_store %arg7[%103, %c0_61, %c0_62], %106 {strides = array<i32>} : memref<8x16x128xf32, #tpu.memory_space<vmem>>, vector<1x16x128xf32>,
      %c7_i32 = arith.constant 7 : i32
      %107 = arith.addi %12, %c7_i32 : i32
      %108 = arith.index_cast %107 : i32 to index
      %c0_63 = arith.constant 0 : index
      %c0_64 = arith.constant 0 : index
      %109 = vector.load %arg8[%108, %c0_63, %c0_64] : memref<16x16x128xf32, #tpu.memory_space<vmem>>, vector<1x16x128xf32>
      %110 = vector.shape_cast %109 : vector<1x16x128xf32> to vector<16x128xf32>
      %c0_65 = arith.constant 0 : index
      %c0_66 = arith.constant 0 : index
      %111 = vector.load %arg4[%c0_65, %c0_66] : memref<128x128xf32, #tpu.memory_space<vmem>>, vector<128x128xf32>
      %cst_67 = arith.constant dense<0.000000e+00> : vector<16x128xf32>
      %112 = tpu.matmul %102, %111, %cst_67 {dimension_numbers = #tpu.dot_dimension_numbers<[1], [0], [0], [1], [0, 0, 1, 1], [], []>} : vector<16x128xf32>, vector<128x128xf32>, vector<16x128xf32> -> vector<16x128xf32>
      %113 = arith.addf %110, %112 : vector<16x128xf32>
      %114 = math.tanh %113 : vector<16x128xf32>
      %115 = arith.index_cast %c7_i32 : i32 to index
      %c0_68 = arith.constant 0 : index
      %c0_69 = arith.constant 0 : index
      %116 = vector.load %arg7[%115, %c0_68, %c0_69] : memref<8x16x128xf32, #tpu.memory_space<vmem>>, vector<1x16x128xf32>
      %117 = vector.shape_cast %116 : vector<1x16x128xf32> to vector<16x128xf32>
      %118 = vector.shape_cast %114 : vector<16x128xf32> to vector<1x16x128xf32>
      tpu.vector_store %arg7[%115, %c0_68, %c0_69], %118 {strides = array<i32>} : memref<8x16x128xf32, #tpu.memory_space<vmem>>, vector<1x16x128xf32>,
      %c8_i32_70 = arith.constant 8 : i32
      %c0_71 = arith.constant 0 : index
      %c0_72 = arith.constant 0 : index
      %119 = vector.load %arg9[%c0_71, %c0_72] : memref<16x128xf32, #tpu.memory_space<vmem>>, vector<16x128xf32>
      tpu.vector_store %arg9[%c0_71, %c0_72], %114 {strides = array<i32>} : memref<16x128xf32, #tpu.memory_space<vmem>>, vector<16x128xf32>,
    } else {
    }
    return
  }
  func.func @transform_0(%arg0: i32, %arg1: i32) -> (i32, i32, i32) {
    %c0_i32 = arith.constant 0 : i32
    %0 = arith.minsi %arg1, %c0_i32 : i32
    %c0_i32_0 = arith.constant 0 : i32
    %c0_i32_1 = arith.constant 0 : i32
    return %0, %arg0, %c0_i32_0 : i32, i32, i32
  }
  func.func @transform_1(%arg0: i32, %arg1: i32) -> (i32, i32) {
    %c0_i32 = arith.constant 0 : i32
    %c0_i32_0 = arith.constant 0 : i32
    %c0_i32_1 = arith.constant 0 : i32
    return %c0_i32, %c0_i32_0 : i32, i32
  }
  func.func @transform_2(%arg0: i32, %arg1: i32) -> (i32, i32) {
    %c0_i32 = arith.constant 0 : i32
    %c0_i32_0 = arith.constant 0 : i32
    %c0_i32_1 = arith.constant 0 : i32
    return %c0_i32, %c0_i32_0 : i32, i32
  }
  func.func @transform_3(%arg0: i32, %arg1: i32) -> (i32, i32) {
    %c0_i32 = arith.constant 0 : i32
    %c0_i32_0 = arith.constant 0 : i32
    %c0_i32_1 = arith.constant 0 : i32
    return %c0_i32, %c0_i32_0 : i32, i32
  }
  func.func @transform_4(%arg0: i32, %arg1: i32) -> (i32, i32) {
    %c0_i32 = arith.constant 0 : i32
    %c0_i32_0 = arith.constant 0 : i32
    return %arg0, %c0_i32 : i32, i32
  }
  func.func @transform_5(%arg0: i32, %arg1: i32) -> (i32, i32, i32) {
    %c1_i32 = arith.constant 1 : i32
    %0 = arith.subi %arg1, %c1_i32 : i32
    %c0_i32 = arith.constant 0 : i32
    %1 = arith.maxsi %0, %c0_i32 : i32
    %c0_i32_0 = arith.constant 0 : i32
    %c0_i32_1 = arith.constant 0 : i32
    return %1, %arg0, %c0_i32_0 : i32, i32, i32
  }
}

</mosaic_0001>

<llo_original>
// kernel: tpu_custom_call.1
$region0: #{tpu_custom_call.1}
  #allocation0 [shape = 'u32[]', space=smem, size = 0x4, offset = 0x4, fixed_abs, tag = 'smem constant byte address 0x4 - core index']
  #allocation1 [shape = 'u32[144,128]{1,0:T(1,128)}', space=vmem, size = 0x12000, scoped, tag = 'internal scratch']
  #allocation2 [shape = 'f32[16,16,128]{2,1,0:T(8,128)}', space=vmem, size = 0x20000, scoped, tag = 'scratch operand']
  #allocation3 [shape = 'f32[16,128]{1,0:T(8,128)}', space=vmem, size = 0x2000, scoped, tag = 'scratch operand']
  %s0 = inlined_call_operand.hbm [shape: f32[8,16,128], index: 0, kind: input, shape index: {}]
  %s1 = inlined_call_operand.hbm [shape: f32[128,128], index: 1, kind: input, shape index: {}]
  %s2 = inlined_call_operand.hbm [shape: f32[128,128], index: 2, kind: input, shape index: {}]
  %s3 = inlined_call_operand.vmem [shape: f32[1,128], index: 3, kind: input, shape index: {}]
  %s4 = inlined_call_operand.hbm [shape: f32[16,128], index: 4, kind: input, shape index: {}]
  %s5 = inlined_call_operand.hbm [shape: f32[8,16,128], index: 5, kind: output, shape index: {}]
  %s6 = sld [smem:[#allocation0]]
  $region81: #{tpu_custom_call.1} parent=0
    _
  %s8 = ssub.s32 1, %s6
  %s9 = scalar_select 0, %s8, %s6
  $region1: #{tpu_custom_call.1} parent=0
    #allocation4 [shape = 'u8[131072]{0}', space=vmem, size = 0x20000, scoped, tag = 'input window, operand 0']
    #allocation5 [shape = 's32[2]{0}', space=sflag, size = 0x8, scoped, tag = 'scoped memory for tpu_custom_call.1']
    #allocation6 [shape = 's32[2]{0}', space=sflag, size = 0x8, scoped, tag = 'scoped memory for tpu_custom_call.1']
    #allocation7 [shape = 'u8[65536]{0}', space=vmem, size = 0x10000, scoped, tag = 'input window, operand 1, single buffered']
    #allocation8 [shape = 's32[1]{0}', space=sflag, size = 0x4, scoped, tag = 'scoped memory for tpu_custom_call.1']
    #allocation9 [shape = 'u8[65536]{0}', space=vmem, size = 0x10000, scoped, tag = 'input window, operand 2, single buffered']
    #allocation10 [shape = 'u8[8192]{0}', space=vmem, size = 0x2000, scoped, tag = 'input window, operand 4, single buffered']
    #allocation11 [shape = 's32[1]{0}', space=sflag, size = 0x4, scoped, tag = 'scoped memory for tpu_custom_call.1']
    #allocation12 [shape = 'u8[131072]{0}', space=vmem, size = 0x20000, scoped, tag = 'output window, operand 0']
    %10 = vsyncpa [#allocation5], 0
    %s11 = scalar_lea.sflag [#allocation5], 1
    %12 = vsyncpa %s11, 0
    %13 = vsyncpa [#allocation8], 0
    %14 = vsyncpa [#allocation11], 0
    %15 = vsyncpa [#allocation6], 0
    %s16 = scalar_lea.sflag [#allocation6], 1
    %17 = vsyncpa %s16, 0
    loop: start=0, step=1, limit=4
    $region2: #{tpu_custom_call.1} parent=1 // loop_pre_header
      _
    $region3: #{tpu_custom_call.1} parent=1 // loop_header
      %s19 = sphi 0, %s23
      %p20 = scmp.ge.s32.totalorder %s19, 4
      %s26 = sphi 0, %s38
      %s27 = sphi 0, %s34
      %s28 = sphi 0, %s26
      %s29 = sphi 0, %s27
      %s30 = sphi 0, %s28
      %s31 = sphi 0, %s29
      %s47 = sphi 0, %s49
      %s50 = sphi 0, %s47
      %s51 = sphi 0, %s50
      %s67 = sphi 0, %s51
      %s71 = sphi 0, %s71
      %s73 = sphi 0, %s71
      %s74 = sphi 0, %s73
      %s88 = sphi 0, %s74
      %s92 = sphi 0, %s92
      %s94 = sphi 0, %s92
      %s95 = sphi 0, %s94
      %s109 = sphi 0, %s95
      %s113 = sphi 0, %s113
      %s115 = sphi 0, %s113
      %s116 = sphi 0, %s115
      %s130 = sphi 0, %s116
      %s136 = sphi 0, %s138
      %s139 = sphi 0, %s136
      %s140 = sphi 0, %s139
      %s156 = sphi 0, %s140
      %s170 = sphi 0, %s172
      %s173 = sphi 0, %s170
      %s174 = sphi 0, %s173
      %s190 = sphi 0, %s174
    $region4: #{tpu_custom_call.1} parent=1 // loop_header_branch
      %22 = sbr.rel (%p20) target = $region8
    $region5: #{tpu_custom_call.1} parent=1 // loop_body
      %s24 = ssub.s32 %s19, 1
      %s25 = ssub.s32 %s19, 2
      %s32 = sadd.s32 1, %s27
      %p33 = scmp.ge.s32.totalorder %s32, 2
      %s34 = scalar_select %p33, 0, %s32
      %s35 = sadd.s32 1, %s26
      %s36 = scalar_select %p33, %s35, %s26
      %p37 = scmp.ge.s32.totalorder %s36, 1
      %s38 = scalar_select %p37, 0, %s36
      %p39 = scmp.lt.s32.totalorder %s27, 0
      %s40 = scalar_select %p39, %s27, 0
      %p41 = scmp.lt.s32.totalorder %s34, 0
      %s42 = scalar_select %p41, %s34, 0
      %s43 = ssub.s32 %s40, %s42
      %s44 = ssub.s32 %s26, %s38
      %s45 = sor.u32 %s43, %s44
      %p46 = scmp.eq.s32.totalorder %s45, 0
      %s48 = sadd.s32 %s47, 1
      %s49 = scalar_select %p46, %s47, %s48
      %p52 = pneg %p46
      %p53 = scmp.eq.s32.totalorder %s19, 1
      %p54 = por %p52, %p53
      %p55 = scmp.ne.s32.totalorder %s47, %s50
      %p56 = scmp.eq.s32.totalorder %s19, 0
      %p57 = por %p55, %p56
      %p58 = scmp.ne.s32.totalorder %s47, %s50
      %p59 = scmp.eq.s32.totalorder %s24, 1
      %p60 = por %p58, %p59
      %p61 = scmp.ne.s32.totalorder %s50, %s51
      %p62 = scmp.eq.s32.totalorder %s24, 0
      %p63 = por %p61, %p62
      %p64 = scmp.ne.s32.totalorder %s50, %s51
      %p65 = scmp.eq.s32.totalorder %s25, 1
      %p66 = por %p64, %p65
      %p68 = scmp.ne.s32.totalorder %s51, %s67
      %p69 = scmp.eq.s32.totalorder %s25, 0
      %p70 = por %p68, %p69
      %s72 = sadd.s32 %s71, 1
      %p75 = scmp.eq.s32.totalorder %s19, 1
      %p76 = scmp.ne.s32.totalorder %s71, %s73
      %p77 = scmp.eq.s32.totalorder %s19, 0
      %p78 = por %p76, %p77
      %p79 = scmp.ne.s32.totalorder %s71, %s73
      %p80 = scmp.eq.s32.totalorder %s24, 1
      %p81 = por %p79, %p80
      %p82 = scmp.ne.s32.totalorder %s73, %s74
      %p83 = scmp.eq.s32.totalorder %s24, 0
      %p84 = por %p82, %p83
      %p85 = scmp.ne.s32.totalorder %s73, %s74
      %p86 = scmp.eq.s32.totalorder %s25, 1
      %p87 = por %p85, %p86
      %p89 = scmp.ne.s32.totalorder %s74, %s88
      %p90 = scmp.eq.s32.totalorder %s25, 0
      %p91 = por %p89, %p90
      %s93 = sadd.s32 %s92, 1
      %p96 = scmp.eq.s32.totalorder %s19, 1
      %p97 = scmp.ne.s32.totalorder %s92, %s94
      %p98 = scmp.eq.s32.totalorder %s19, 0
      %p99 = por %p97, %p98
      %p100 = scmp.ne.s32.totalorder %s92, %s94
      %p101 = scmp.eq.s32.totalorder %s24, 1
      %p102 = por %p100, %p101
      %p103 = scmp.ne.s32.totalorder %s94, %s95
      %p104 = scmp.eq.s32.totalorder %s24, 0
      %p105 = por %p103, %p104
      %p106 = scmp.ne.s32.totalorder %s94, %s95
      %p107 = scmp.eq.s32.totalorder %s25, 1
      %p108 = por %p106, %p107
      %p110 = scmp.ne.s32.totalorder %s95, %s109
      %p111 = scmp.eq.s32.totalorder %s25, 0
      %p112 = por %p110, %p111
      %s114 = sadd.s32 %s113, 1
      %p117 = scmp.eq.s32.totalorder %s19, 1
      %p118 = scmp.ne.s32.totalorder %s113, %s115
      %p119 = scmp.eq.s32.totalorder %s19, 0
      %p120 = por %p118, %p119
      %p121 = scmp.ne.s32.totalorder %s113, %s115
      %p122 = scmp.eq.s32.totalorder %s24, 1
      %p123 = por %p121, %p122
      %p124 = scmp.ne.s32.totalorder %s115, %s116
      %p125 = scmp.eq.s32.totalorder %s24, 0
      %p126 = por %p124, %p125
      %p127 = scmp.ne.s32.totalorder %s115, %s116
      %p128 = scmp.eq.s32.totalorder %s25, 1
      %p129 = por %p127, %p128
      %p131 = scmp.ne.s32.totalorder %s116, %s130
      %p132 = scmp.eq.s32.totalorder %s25, 0
      %p133 = por %p131, %p132
      %s134 = ssub.s32 %s26, %s38
      %p135 = scmp.eq.s32.totalorder %s134, 0
      %s137 = sadd.s32 %s136, 1
      %s138 = scalar_select %p135, %s136, %s137
      %p141 = pneg %p135
      %p142 = scmp.eq.s32.totalorder %s19, 1
      %p143 = por %p141, %p142
      %p144 = scmp.ne.s32.totalorder %s136, %s139
      %p145 = scmp.eq.s32.totalorder %s19, 0
      %p146 = por %p144, %p145
      %p147 = scmp.ne.s32.totalorder %s136, %s139
      %p148 = scmp.eq.s32.totalorder %s24, 1
      %p149 = por %p147, %p148
      %p150 = scmp.ne.s32.totalorder %s139, %s140
      %p151 = scmp.eq.s32.totalorder %s24, 0
      %p152 = por %p150, %p151
      %p153 = scmp.ne.s32.totalorder %s139, %s140
      %p154 = scmp.eq.s32.totalorder %s25, 1
      %p155 = por %p153, %p154
      %p157 = scmp.ne.s32.totalorder %s140, %s156
      %p158 = scmp.eq.s32.totalorder %s25, 0
      %p159 = por %p157, %p158
      %s160 = ssub.s32 %s27, 1
      %p161 = scmp.gt.s32.totalorder %s160, 0
      %s162 = scalar_select %p161, %s160, 0
      %s163 = ssub.s32 %s34, 1
      %p164 = scmp.gt.s32.totalorder %s163, 0
      %s165 = scalar_select %p164, %s163, 0
      %s166 = ssub.s32 %s162, %s165
      %s167 = ssub.s32 %s26, %s38
      %s168 = sor.u32 %s166, %s167
      %p169 = scmp.eq.s32.totalorder %s168, 0
      %s171 = sadd.s32 %s170, 1
      %s172 = scalar_select %p169, %s170, %s171
      %p175 = pneg %p169
      %p176 = scmp.eq.s32.totalorder %s19, 1
      %p177 = por %p175, %p176
      %p178 = scmp.ne.s32.totalorder %s170, %s173
      %p179 = scmp.eq.s32.totalorder %s19, 0
      %p180 = por %p178, %p179
      %p181 = scmp.ne.s32.totalorder %s170, %s173
      %p182 = scmp.eq.s32.totalorder %s24, 1
      %p183 = por %p181, %p182
      %p184 = scmp.ne.s32.totalorder %s173, %s174
      %p185 = scmp.eq.s32.totalorder %s24, 0
      %p186 = por %p184, %p185
      %p187 = scmp.ne.s32.totalorder %s173, %s174
      %p188 = scmp.eq.s32.totalorder %s25, 1
      %p189 = por %p187, %p188
      %p191 = scmp.ne.s32.totalorder %s174, %s190
      %p192 = scmp.eq.s32.totalorder %s25, 0
      %p193 = por %p191, %p192
      %p194 = scmp.le.s32.totalorder 1, %s19
      %p195 = scmp.lt.s32.totalorder %s19, 3
      %p196 = pnand %p194, %p195
      %p197 = pneg %p196
      // Predicated region
      $region9: #{tpu_custom_call.1} parent=5 // pred_check
        _
      $region10: #{tpu_custom_call.1} parent=5 // pred_check_branch
        %199 = sbr.rel (%p196) target = $region12
      $region11: #{tpu_custom_call.1} parent=5 // pred_region
        %s200 = ssub.s32 %s19, 1
        // Predicated region
        $region13: #{tpu_custom_call.1} parent=11 // pred_check
          %p201 = pneg %p84
        $region14: #{tpu_custom_call.1} parent=11 // pred_check_branch
          %203 = sbr.rel (%p201) target = $region16
        $region15: #{tpu_custom_call.1} parent=11 // pred_region
          %s205 = ssub.s32 2048, 2048
          %206 = vsyncadd [#allocation8], %s205
          %s207 = sshll.u32 [#allocation7], 4
          %s208 = int_to_ptr.vmem [resolvable:$true] %s207
          %213 = dma.hbm_to_vmem [thread:$0]  %s1, 2048, %s208, [#allocation8], 128, 128, 8
        $region16: #{tpu_custom_call.1} parent=11 // pred_fallthru
          _
        // Predicated region
        $region17: #{tpu_custom_call.1} parent=11 // pred_check
          %p214 = pneg %p105
        $region18: #{tpu_custom_call.1} parent=11 // pred_check_branch
          %216 = sbr.rel (%p214) target = $region20
        $region19: #{tpu_custom_call.1} parent=11 // pred_region
          %s218 = ssub.s32 2048, 2048
          %219 = vsyncadd [#allocation8], %s218
          %s220 = sshll.u32 [#allocation9], 4
          %s221 = int_to_ptr.vmem [resolvable:$true] %s220
          %226 = dma.hbm_to_vmem [thread:$0]  %s2, 2048, %s221, [#allocation8], 128, 128, 8
        $region20: #{tpu_custom_call.1} parent=11 // pred_fallthru
          _
        // Predicated region
        $region21: #{tpu_custom_call.1} parent=11 // pred_check
          %p227 = pneg %p126
        $region22: #{tpu_custom_call.1} parent=11 // pred_check_branch
          %229 = sbr.rel (%p227) target = $region24
        $region23: #{tpu_custom_call.1} parent=11 // pred_region
          _
        $region24: #{tpu_custom_call.1} parent=11 // pred_fallthru
          _
        // Predicated region
        $region25: #{tpu_custom_call.1} parent=11 // pred_check
          %p230 = pneg %p152
        $region26: #{tpu_custom_call.1} parent=11 // pred_check_branch
          %232 = sbr.rel (%p230) target = $region28
        $region27: #{tpu_custom_call.1} parent=11 // pred_region
          %s233 = smul.u32 2, %s28
          %s235 = ssub.s32 256, 256
          %236 = vsyncadd [#allocation11], %s235
          %s237 = smul.addr %s233, 128
          %s238 = scalar_lea.hbm %s4, %s237
          %s239 = sshll.u32 [#allocation10], 4
          %s240 = int_to_ptr.vmem [resolvable:$true] %s239
          %245 = dma.hbm_to_vmem [thread:$0]  %s238, 256, %s240, [#allocation11], 128, 128, 8
        $region28: #{tpu_custom_call.1} parent=11 // pred_fallthru
          _
      $region12: #{tpu_custom_call.1} parent=5 // pred_fallthru
        _
      %p246 = scmp.lt.s32.totalorder %s19, 2
      // Predicated region
      $region29: #{tpu_custom_call.1} parent=5 // pred_check
        %p247 = pneg %p246
      $region30: #{tpu_custom_call.1} parent=5 // pred_check_branch
        %249 = sbr.rel (%p247) target = $region32
      $region31: #{tpu_custom_call.1} parent=5 // pred_region
        // Predicated region
        $region33: #{tpu_custom_call.1} parent=31 // pred_check
          %p250 = pneg %p57
        $region34: #{tpu_custom_call.1} parent=31 // pred_check_branch
          %252 = sbr.rel (%p250) target = $region36
        $region35: #{tpu_custom_call.1} parent=31 // pred_region
          %s253 = sand.u32 %s47, 1
          %s254 = scalar_lea.sflag [#allocation5], %s253
          %s255 = sand.u32 %s47, 1
          %s256 = smul.addr %s255, 128
          %s257 = scalar_lea.vmem [#allocation4], %s256
          %p258 = scmp.lt.s32.totalorder %s27, 0
          %s259 = scalar_select %p258, %s27, 0
          %s260 = smul.u32 8, %s259
          %s261 = smul.u32 2, %s26
          %s263 = ssub.s32 2048, 2048
          %264 = vsyncadd %s254, %s263
          %s265 = smul.addr %s260, 2
          %s266 = sadd.s32 %s261, %s265
          %s267 = smul.addr %s266, 128
          %s268 = scalar_lea.hbm %s0, %s267
          %s269 = sshll.u32 %s257, 4
          %s270 = int_to_ptr.vmem [resolvable:$true] %s269
          %275 = dma.hbm_to_vmem [thread:$0]  %s268, 2048, %s270, %s254, 128, 128, 8
        $region36: #{tpu_custom_call.1} parent=31 // pred_fallthru
          _
      $region32: #{tpu_custom_call.1} parent=5 // pred_fallthru
        _
      %p276 = scmp.le.s32.totalorder 1, %s19
      %p277 = scmp.lt.s32.totalorder %s19, 3
      %p278 = pnand %p276, %p277
      %p279 = pneg %p278
      // Predicated region
      $region37: #{tpu_custom_call.1} parent=5 // pred_check
        _
      $region38: #{tpu_custom_call.1} parent=5 // pred_check_branch
        %281 = sbr.rel (%p278) target = $region40
      $region39: #{tpu_custom_call.1} parent=5 // pred_region
        %s282 = ssub.s32 %s19, 1
        %s283 = sand.u32 %s50, 1
        %s284 = scalar_lea.sflag [#allocation5], %s283
        %s285 = sand.u32 %s50, 1
        %s286 = smul.addr %s285, 128
        %s287 = scalar_lea.vmem [#allocation4], %s286
        // Predicated region
        $region41: #{tpu_custom_call.1} parent=39 // pred_check
          %p288 = pneg %p63
        $region42: #{tpu_custom_call.1} parent=39 // pred_check_branch
          %290 = sbr.rel (%p288) target = $region44
        $region43: #{tpu_custom_call.1} parent=39 // pred_region
          %291 = dma.done %s284, 2048
        $region44: #{tpu_custom_call.1} parent=39 // pred_fallthru
          _
        // Predicated region
        $region45: #{tpu_custom_call.1} parent=39 // pred_check
          %p292 = pneg %p84
        $region46: #{tpu_custom_call.1} parent=39 // pred_check_branch
          %294 = sbr.rel (%p292) target = $region48
        $region47: #{tpu_custom_call.1} parent=39 // pred_region
          %295 = dma.done [#allocation8], 2048
        $region48: #{tpu_custom_call.1} parent=39 // pred_fallthru
          _
        // Predicated region
        $region49: #{tpu_custom_call.1} parent=39 // pred_check
          %p296 = pneg %p105
        $region50: #{tpu_custom_call.1} parent=39 // pred_check_branch
          %298 = sbr.rel (%p296) target = $region52
        $region51: #{tpu_custom_call.1} parent=39 // pred_region
          %299 = dma.done [#allocation8], 2048
        $region52: #{tpu_custom_call.1} parent=39 // pred_fallthru
          _
        // Predicated region
        $region53: #{tpu_custom_call.1} parent=39 // pred_check
          %p300 = pneg %p152
        $region54: #{tpu_custom_call.1} parent=39 // pred_check_branch
          %302 = sbr.rel (%p300) target = $region56
        $region55: #{tpu_custom_call.1} parent=39 // pred_region
          %303 = dma.done [#allocation11], 256
        $region56: #{tpu_custom_call.1} parent=39 // pred_fallthru
          _
        %s304 = sand.u32 %s50, 1
        %s305 = scalar_lea.sflag [#allocation5], %s304
        %s306 = sand.u32 %s50, 1
        %s307 = smul.addr %s306, 128
        %s308 = scalar_lea.vmem [#allocation4], %s307
        %p309 = pneg %p63
        %p310 = pneg %p60
        %p311 = pneg %p84
        %p312 = pneg %p81
        %p313 = pneg %p105
        %p314 = pneg %p102
        %p315 = pneg %p126
        %p316 = pneg %p123
        %p317 = pneg %p152
        %p318 = pneg %p149
        %p319 = pneg %p186
        %p320 = pneg %p183
        %s321 = sand.u32 %s173, 1
        %s322 = scalar_lea.sflag [#allocation6], %s321
        %s323 = sand.u32 %s173, 1
        %s324 = smul.addr %s323, 128
        %s325 = scalar_lea.vmem [#allocation12], %s324
        %p326 = scmp.lt.s32.totalorder %s29, 0
        %s327 = scalar_select %p326, %s29, 0
        %s328 = smul.u32 8, %s327
        %s329 = smul.u32 2, %s28
        %s330 = smul.u32 2, %s28
        %s331 = ssub.s32 %s29, 1
        %p332 = scmp.gt.s32.totalorder %s331, 0
        %s333 = scalar_select %p332, %s331, 0
        %s334 = smul.u32 8, %s333
        %s335 = smul.u32 2, %s28
        %p336 = scmp.lt.s32.totalorder %s29, 0
        %s337 = ssub.s32 0, %s29
        %s338 = scalar_select %p336, %s337, %s29
        %s339 = sand.u32 %s338, 1
        %s340 = ssub.s32 0, %s339
        %s341 = scalar_select %p336, %s340, %s339
        %p342 = scmp.ne.s32.totalorder %s341, 0
        %p343 = scmp.lt.s32.totalorder %s341, 0
        %p344 = pnand %p343, %p342
        %p345 = pneg %p344
        %s346 = sadd.s32 %s341, 2
        %s347 = scalar_select %p345, %s346, %s341
        %s348 = ssub.s32 1, %s347
        %s349 = smul.u32 %s347, 8
        %s350 = smul.u32 %s348, 8
        %p351 = scmp.eq.s32.totalorder %s29, 0
        // Predicated region
        $region57: #{tpu_custom_call.1} parent=39 // pred_check
          %p352 = pneg %p351
        $region58: #{tpu_custom_call.1} parent=39 // pred_check_branch
          %354 = sbr.rel (%p352) target = $region60
        $region59: #{tpu_custom_call.1} parent=39 // pred_region
          %v355 = vld [vmem:[#allocation10] sm:$0xff]
          %v356 = vld [vmem:[#allocation10 + $0x8] sm:$0xff]
          %357 = vst [vmem:[#allocation3] sm:$0xff] %v355
          %358 = vst [vmem:[#allocation3 + $0x8] sm:$0xff] %v356
        $region60: #{tpu_custom_call.1} parent=39 // pred_fallthru
          _
        %p359 = scmp.lt.s32.totalorder %s29, 1
        // Predicated region
        $region61: #{tpu_custom_call.1} parent=39 // pred_check
          %p360 = pneg %p359
        $region62: #{tpu_custom_call.1} parent=39 // pred_check_branch
          %362 = sbr.rel (%p360) target = $region64
        $region63: #{tpu_custom_call.1} parent=39 // pred_region
          %v363 = vld [vmem:[%s287] sm:$0xff]
          %v364 = vld [vmem:[%s287 + $0x8] sm:$0xff]
          %v365 = vld [vmem:[%s287 + $0x10] sm:$0xff]
          %v366 = vld [vmem:[%s287 + $0x18] sm:$0xff]
          %v367 = vld [vmem:[%s287 + $0x20] sm:$0xff]
          %v368 = vld [vmem:[%s287 + $0x28] sm:$0xff]
          %v369 = vld [vmem:[%s287 + $0x30] sm:$0xff]
          %v370 = vld [vmem:[%s287 + $0x38] sm:$0xff]
          %v371 = vld [vmem:[%s287 + $0x40] sm:$0xff]
          %v372 = vld [vmem:[%s287 + $0x48] sm:$0xff]
          %v373 = vld [vmem:[%s287 + $0x50] sm:$0xff]
          %v374 = vld [vmem:[%s287 + $0x58] sm:$0xff]
          %v375 = vld [vmem:[%s287 + $0x60] sm:$0xff]
          %v376 = vld [vmem:[%s287 + $0x68] sm:$0xff]
          %v377 = vld [vmem:[%s287 + $0x70] sm:$0xff]
          %v378 = vld [vmem:[%s287 + $0x78] sm:$0xff]
          %v379 = vld [vmem:[#allocation7] sm:$0xff]
          %v380 = vld [vmem:[#allocation7 + $0x8] sm:$0xff]
          %v381 = vld [vmem:[#allocation7 + $0x10] sm:$0xff]
          %v382 = vld [vmem:[#allocation7 + $0x18] sm:$0xff]
          %v383 = vld [vmem:[#allocation7 + $0x20] sm:$0xff]
          %v384 = vld [vmem:[#allocation7 + $0x28] sm:$0xff]
          %v385 = vld [vmem:[#allocation7 + $0x30] sm:$0xff]
          %v386 = vld [vmem:[#allocation7 + $0x38] sm:$0xff]
          %v387 = vld [vmem:[#allocation7 + $0x40] sm:$0xff]
          %v388 = vld [vmem:[#allocation7 + $0x48] sm:$0xff]
          %v389 = vld [vmem:[#allocation7 + $0x50] sm:$0xff]
          %v390 = vld [vmem:[#allocation7 + $0x58] sm:$0xff]
          %v391 = vld [vmem:[#allocation7 + $0x60] sm:$0xff]
          %v392 = vld [vmem:[#allocation7 + $0x68] sm:$0xff]
          %v393 = vld [vmem:[#allocation7 + $0x70] sm:$0xff]
          %v394 = vld [vmem:[#allocation7 + $0x78] sm:$0xff]
          %v395 = vld [vmem:[%s3] sm:$0x1]
          %v397 = vlaneseq
          %v398 = vshrl.u32 %v397, 7
          %v399 = vsub.s32 0, %v398
          %v400 = vrot.slane %v395, %v399
          %402 = vmatprep.subr.mxu0 0.0
          %403 = vmatpush1.msra.mxu0 %v379
          %404 = vmatprep.subr.mxu0 0.0
          %405 = vmatpush1.msra.mxu0 %v380
          %406 = vmatprep.subr.mxu0 0.0
          %407 = vmatpush1.msra.mxu0 %v381
          %408 = vmatprep.subr.mxu0 0.0
          %409 = vmatpush1.msra.mxu0 %v382
          %410 = vmatprep.subr.mxu0 0.0
          %411 = vmatpush1.msra.mxu0 %v383
          %412 = vmatprep.subr.mxu0 0.0
          %413 = vmatpush1.msra.mxu0 %v384
          %414 = vmatprep.subr.mxu0 0.0
          %415 = vmatpush1.msra.mxu0 %v385
          %416 = vmatprep.subr.mxu0 0.0
          %417 = vmatpush1.msra.mxu0 %v386
          %418 = vmatprep.subr.mxu0 0.0
          %419 = vmatpush1.msra.mxu0 %v387
          %420 = vmatprep.subr.mxu0 0.0
          %421 = vmatpush1.msra.mxu0 %v388
          %422 = vmatprep.subr.mxu0 0.0
          %423 = vmatpush1.msra.mxu0 %v389
          %424 = vmatprep.subr.mxu0 0.0
          %425 = vmatpush1.msra.mxu0 %v390
          %426 = vmatprep.subr.mxu0 0.0
          %427 = vmatpush1.msra.mxu0 %v391
          %428 = vmatprep.subr.mxu0 0.0
          %429 = vmatpush1.msra.mxu0 %v392
          %430 = vmatprep.subr.mxu0 0.0
          %431 = vmatpush1.msra.mxu0 %v393
          %432 = vmatprep.subr.mxu0 0.0
          %433 = vmatpush1.msra.mxu0 %v394
          %434 = vmatprep.subr.mxu0 0.0
          %435 = vmatpush1.msra.mxu0 0.0
          %436 = vmatprep.subr.mxu0 0.0
          %437 = vmatpush1.msra.mxu0 0.0
          %438 = vmatprep.subr.mxu0 0.0
          %439 = vmatpush1.msra.mxu0 0.0
          %440 = vmatprep.subr.mxu0 0.0
          %441 = vmatpush1.msra.mxu0 0.0
          %442 = vmatprep.subr.mxu0 0.0
          %443 = vmatpush1.msra.mxu0 0.0
          %444 = vmatprep.subr.mxu0 0.0
          %445 = vmatpush1.msra.mxu0 0.0
          %446 = vmatprep.subr.mxu0 0.0
          %447 = vmatpush1.msra.mxu0 0.0
          %448 = vmatprep.subr.mxu0 0.0
          %449 = vmatpush1.msra.mxu0 0.0
          %450 = vmatprep.subr.mxu0 0.0
          %451 = vmatpush1.msra.mxu0 0.0
          %452 = vmatprep.subr.mxu0 0.0
          %453 = vmatpush1.msra.mxu0 0.0
          %454 = vmatprep.subr.mxu0 0.0
          %455 = vmatpush1.msra.mxu0 0.0
          %456 = vmatprep.subr.mxu0 0.0
          %457 = vmatpush1.msra.mxu0 0.0
          %458 = vmatprep.subr.mxu0 0.0
          %459 = vmatpush1.msra.mxu0 0.0
          %460 = vmatprep.subr.mxu0 0.0
          %461 = vmatpush1.msra.mxu0 0.0
          %462 = vmatprep.subr.mxu0 0.0
          %463 = vmatpush1.msra.mxu0 0.0
          %464 = vmatprep.subr.mxu0 0.0
          %465 = vmatpush1.msra.mxu0 0.0
          %466 = vmatprep.mubr.f32.mxu0 0.0
          %467 = vmatmul.mubr.f32.gmra.mrb[0].mxu0 %v363
          %v468 = vpop.f32.mrb[0].mxu0
          %v469 = vadd.f32 %v400, %v468
          %v470 = vpop.f32.mrb[0].mxu0
          %471 = vmatprep.mubr.f32.mxu0 0.0
          %472 = vmatmul.mubr.f32.gmra.mrb[0].mxu0 %v364
          %v473 = vpop.f32.mrb[0].mxu0
          %v474 = vadd.f32 %v400, %v473
          %v475 = vpop.f32.mrb[0].mxu0
          %476 = vmatprep.mubr.f32.mxu0 0.0
          %477 = vmatmul.mubr.f32.gmra.mrb[0].mxu0 %v365
          %v478 = vpop.f32.mrb[0].mxu0
          %v479 = vadd.f32 %v400, %v478
          %v480 = vpop.f32.mrb[0].mxu0
          %481 = vmatprep.mubr.f32.mxu0 0.0
          %482 = vmatmul.mubr.f32.gmra.mrb[0].mxu0 %v366
          %v483 = vpop.f32.mrb[0].mxu0
          %v484 = vadd.f32 %v400, %v483
          %v485 = vpop.f32.mrb[0].mxu0
          %486 = vmatprep.mubr.f32.mxu0 0.0
          %487 = vmatmul.mubr.f32.gmra.mrb[0].mxu0 %v367
          %v488 = vpop.f32.mrb[0].mxu0
          %v489 = vadd.f32 %v400, %v488
          %v490 = vpop.f32.mrb[0].mxu0
          %491 = vmatprep.mubr.f32.mxu0 0.0
          %492 = vmatmul.mubr.f32.gmra.mrb[0].mxu0 %v368
          %v493 = vpop.f32.mrb[0].mxu0
          %v494 = vadd.f32 %v400, %v493
          %v495 = vpop.f32.mrb[0].mxu0
          %496 = vmatprep.mubr.f32.mxu0 0.0
          %497 = vmatmul.mubr.f32.gmra.mrb[0].mxu0 %v369
          %v498 = vpop.f32.mrb[0].mxu0
          %v499 = vadd.f32 %v400, %v498
          %v500 = vpop.f32.mrb[0].mxu0
          %501 = vmatprep.mubr.f32.mxu0 0.0
          %502 = vmatmul.mubr.f32.gmra.mrb[0].mxu0 %v370
          %v503 = vpop.f32.mrb[0].mxu0
          %v504 = vadd.f32 %v400, %v503
          %v505 = vpop.f32.mrb[0].mxu0
          %506 = vmatprep.mubr.f32.mxu0 0.0
          %507 = vmatmul.mubr.f32.gmra.mrb[0].mxu0 %v371
          %v508 = vpop.f32.mrb[0].mxu0
          %v509 = vadd.f32 %v400, %v508
          %v510 = vpop.f32.mrb[0].mxu0
          %511 = vmatprep.mubr.f32.mxu0 0.0
          %512 = vmatmul.mubr.f32.gmra.mrb[0].mxu0 %v372
          %v513 = vpop.f32.mrb[0].mxu0
          %v514 = vadd.f32 %v400, %v513
          %v515 = vpop.f32.mrb[0].mxu0
          %516 = vmatprep.mubr.f32.mxu0 0.0
          %517 = vmatmul.mubr.f32.gmra.mrb[0].mxu0 %v373
          %v518 = vpop.f32.mrb[0].mxu0
          %v519 = vadd.f32 %v400, %v518
          %v520 = vpop.f32.mrb[0].mxu0
          %521 = vmatprep.mubr.f32.mxu0 0.0
          %522 = vmatmul.mubr.f32.gmra.mrb[0].mxu0 %v374
          %v523 = vpop.f32.mrb[0].mxu0
          %v524 = vadd.f32 %v400, %v523
          %v525 = vpop.f32.mrb[0].mxu0
          %526 = vmatprep.mubr.f32.mxu0 0.0
          %527 = vmatmul.mubr.f32.gmra.mrb[0].mxu0 %v375
          %v528 = vpop.f32.mrb[0].mxu0
          %v529 = vadd.f32 %v400, %v528
          %v530 = vpop.f32.mrb[0].mxu0
          %531 = vmatprep.mubr.f32.mxu0 0.0
          %532 = vmatmul.mubr.f32.gmra.mrb[0].mxu0 %v376
          %v533 = vpop.f32.mrb[0].mxu0
          %v534 = vadd.f32 %v400, %v533
          %v535 = vpop.f32.mrb[0].mxu0
          %536 = vmatprep.mubr.f32.mxu0 0.0
          %537 = vmatmul.mubr.f32.gmra.mrb[0].mxu0 %v377
          %v538 = vpop.f32.mrb[0].mxu0
          %v539 = vadd.f32 %v400, %v538
          %v540 = vpop.f32.mrb[0].mxu0
          %541 = vmatprep.mubr.f32.mxu0 0.0
          %542 = vmatmul.mubr.f32.gmra.mrb[0].mxu0 %v378
          %v543 = vpop.f32.mrb[0].mxu0
          %v544 = vadd.f32 %v400, %v543
          %v545 = vpop.f32.mrb[0].mxu0
          %546 = vdwg.mxu0
          %s547 = smul.u32 %s349, 16
          %s548 = scalar_lea.vmem [#allocation2], %s547
          %549 = vst [vmem:[%s548] sm:$0xff] %v469
          %550 = vst [vmem:[%s548 + $0x8] sm:$0xff] %v474
          %551 = vst [vmem:[%s548 + $0x10] sm:$0xff] %v479
          %552 = vst [vmem:[%s548 + $0x18] sm:$0xff] %v484
          %553 = vst [vmem:[%s548 + $0x20] sm:$0xff] %v489
          %554 = vst [vmem:[%s548 + $0x28] sm:$0xff] %v494
          %555 = vst [vmem:[%s548 + $0x30] sm:$0xff] %v499
          %556 = vst [vmem:[%s548 + $0x38] sm:$0xff] %v504
          %557 = vst [vmem:[%s548 + $0x40] sm:$0xff] %v509
          %558 = vst [vmem:[%s548 + $0x48] sm:$0xff] %v514
          %559 = vst [vmem:[%s548 + $0x50] sm:$0xff] %v519
          %560 = vst [vmem:[%s548 + $0x58] sm:$0xff] %v524
          %561 = vst [vmem:[%s548 + $0x60] sm:$0xff] %v529
          %562 = vst [vmem:[%s548 + $0x68] sm:$0xff] %v534
          %563 = vst [vmem:[%s548 + $0x70] sm:$0xff] %v539
          %564 = vst [vmem:[%s548 + $0x78] sm:$0xff] %v544
        $region64: #{tpu_custom_call.1} parent=39 // pred_fallthru
          _
        %p565 = scmp.gt.s32.totalorder %s29, 0
        // Predicated region
        $region65: #{tpu_custom_call.1} parent=39 // pred_check
          %p566 = pneg %p565
        $region66: #{tpu_custom_call.1} parent=39 // pred_check_branch
          %568 = sbr.rel (%p566) target = $region68
        $region67: #{tpu_custom_call.1} parent=39 // pred_region
          %v569 = vld [vmem:[#allocation3] sm:$0xff]
          %v570 = vld [vmem:[#allocation3 + $0x8] sm:$0xff]
          %s571 = smul.u32 %s350, 16
          %s572 = scalar_lea.vmem [#allocation2], %s571
          %v573 = vld [vmem:[%s572] sm:$0xff]
          %v574 = vld [vmem:[%s572 + $0x8] sm:$0xff]
          %v575 = vld [vmem:[#allocation9] sm:$0xff]
          %v576 = vld [vmem:[#allocation9 + $0x8] sm:$0xff]
          %v577 = vld [vmem:[#allocation9 + $0x10] sm:$0xff]
          %v578 = vld [vmem:[#allocation9 + $0x18] sm:$0xff]
          %v579 = vld [vmem:[#allocation9 + $0x20] sm:$0xff]
          %v580 = vld [vmem:[#allocation9 + $0x28] sm:$0xff]
          %v581 = vld [vmem:[#allocation9 + $0x30] sm:$0xff]
          %v582 = vld [vmem:[#allocation9 + $0x38] sm:$0xff]
          %v583 = vld [vmem:[#allocation9 + $0x40] sm:$0xff]
          %v584 = vld [vmem:[#allocation9 + $0x48] sm:$0xff]
          %v585 = vld [vmem:[#allocation9 + $0x50] sm:$0xff]
          %v586 = vld [vmem:[#allocation9 + $0x58] sm:$0xff]
          %v587 = vld [vmem:[#allocation9 + $0x60] sm:$0xff]
          %v588 = vld [vmem:[#allocation9 + $0x68] sm:$0xff]
          %v589 = vld [vmem:[#allocation9 + $0x70] sm:$0xff]
          %v590 = vld [vmem:[#allocation9 + $0x78] sm:$0xff]
          %591 = vmatprep.subr.mxu0 0.0
          %592 = vmatpush1.msra.mxu0 %v575
          %593 = vmatprep.subr.mxu0 0.0
          %594 = vmatpush1.msra.mxu0 %v576
          %595 = vmatprep.subr.mxu0 0.0
          %596 = vmatpush1.msra.mxu0 %v577
          %597 = vmatprep.subr.mxu0 0.0
          %598 = vmatpush1.msra.mxu0 %v578
          %599 = vmatprep.subr.mxu0 0.0
          %600 = vmatpush1.msra.mxu0 %v579
          %601 = vmatprep.subr.mxu0 0.0
          %602 = vmatpush1.msra.mxu0 %v580
          %603 = vmatprep.subr.mxu0 0.0
          %604 = vmatpush1.msra.mxu0 %v581
          %605 = vmatprep.subr.mxu0 0.0
          %606 = vmatpush1.msra.mxu0 %v582
          %607 = vmatprep.subr.mxu0 0.0
          %608 = vmatpush1.msra.mxu0 %v583
          %609 = vmatprep.subr.mxu0 0.0
          %610 = vmatpush1.msra.mxu0 %v584
          %611 = vmatprep.subr.mxu0 0.0
          %612 = vmatpush1.msra.mxu0 %v585
          %613 = vmatprep.subr.mxu0 0.0
          %614 = vmatpush1.msra.mxu0 %v586
          %615 = vmatprep.subr.mxu0 0.0
          %616 = vmatpush1.msra.mxu0 %v587
          %617 = vmatprep.subr.mxu0 0.0
          %618 = vmatpush1.msra.mxu0 %v588
          %619 = vmatprep.subr.mxu0 0.0
          %620 = vmatpush1.msra.mxu0 %v589
          %621 = vmatprep.subr.mxu0 0.0
          %622 = vmatpush1.msra.mxu0 %v590
          %623 = vmatprep.subr.mxu0 0.0
          %624 = vmatpush1.msra.mxu0 0.0
          %625 = vmatprep.subr.mxu0 0.0
          %626 = vmatpush1.msra.mxu0 0.0
          %627 = vmatprep.subr.mxu0 0.0
          %628 = vmatpush1.msra.mxu0 0.0
          %629 = vmatprep.subr.mxu0 0.0
          %630 = vmatpush1.msra.mxu0 0.0
          %631 = vmatprep.subr.mxu0 0.0
          %632 = vmatpush1.msra.mxu0 0.0
          %633 = vmatprep.subr.mxu0 0.0
          %634 = vmatpush1.msra.mxu0 0.0
          %635 = vmatprep.subr.mxu0 0.0
          %636 = vmatpush1.msra.mxu0 0.0
          %637 = vmatprep.subr.mxu0 0.0
          %638 = vmatpush1.msra.mxu0 0.0
          %639 = vmatprep.subr.mxu0 0.0
          %640 = vmatpush1.msra.mxu0 0.0
          %641 = vmatprep.subr.mxu0 0.0
          %642 = vmatpush1.msra.mxu0 0.0
          %643 = vmatprep.subr.mxu0 0.0
          %644 = vmatpush1.msra.mxu0 0.0
          %645 = vmatprep.subr.mxu0 0.0
          %646 = vmatpush1.msra.mxu0 0.0
          %647 = vmatprep.subr.mxu0 0.0
          %648 = vmatpush1.msra.mxu0 0.0
          %649 = vmatprep.subr.mxu0 0.0
          %650 = vmatpush1.msra.mxu0 0.0
          %651 = vmatprep.subr.mxu0 0.0
          %652 = vmatpush1.msra.mxu0 0.0
          %653 = vmatprep.subr.mxu0 0.0
          %654 = vmatpush1.msra.mxu0 0.0
          %655 = vmatprep.mubr.f32.mxu0 0.0
          %656 = vmatmul.mubr.f32.gmra.mrb[0].mxu0 %v569
          %v657 = vpop.f32.mrb[0].mxu0
          %v658 = vadd.f32 0.0, %v657
          %v659 = vpop.f32.mrb[0].mxu0
          %660 = vmatprep.mubr.f32.mxu0 0.0
          %661 = vmatmul.mubr.f32.gmra.mrb[0].mxu0 %v570
          %v662 = vpop.f32.mrb[0].mxu0
          %v663 = vadd.f32 0.0, %v662
          %v664 = vpop.f32.mrb[0].mxu0
          %665 = vdwg.mxu0
          %v666 = vadd.f32 %v573, %v658
          %v667 = vadd.f32 %v574, %v663
          %v668 = vtanh.pop %v666
          %v669 = vtanh.pop %v667
          %670 = vst [vmem:[%s325] sm:$0xff] %v668
          %671 = vst [vmem:[%s325 + $0x8] sm:$0xff] %v669
          %s672 = sadd.s32 %s350, 1
          %s673 = smul.u32 %s672, 16
          %s674 = scalar_lea.vmem [#allocation2], %s673
          %v675 = vld [vmem:[%s674] sm:$0xff]
          %v676 = vld [vmem:[%s674 + $0x8] sm:$0xff]
          %v677 = vld [vmem:[#allocation9] sm:$0xff]
          %v678 = vld [vmem:[#allocation9 + $0x8] sm:$0xff]
          %v679 = vld [vmem:[#allocation9 + $0x10] sm:$0xff]
          %v680 = vld [vmem:[#allocation9 + $0x18] sm:$0xff]
          %v681 = vld [vmem:[#allocation9 + $0x20] sm:$0xff]
          %v682 = vld [vmem:[#allocation9 + $0x28] sm:$0xff]
          %v683 = vld [vmem:[#allocation9 + $0x30] sm:$0xff]
          %v684 = vld [vmem:[#allocation9 + $0x38] sm:$0xff]
          %v685 = vld [vmem:[#allocation9 + $0x40] sm:$0xff]
          %v686 = vld [vmem:[#allocation9 + $0x48] sm:$0xff]
          %v687 = vld [vmem:[#allocation9 + $0x50] sm:$0xff]
          %v688 = vld [vmem:[#allocation9 + $0x58] sm:$0xff]
          %v689 = vld [vmem:[#allocation9 + $0x60] sm:$0xff]
          %v690 = vld [vmem:[#allocation9 + $0x68] sm:$0xff]
          %v691 = vld [vmem:[#allocation9 + $0x70] sm:$0xff]
          %v692 = vld [vmem:[#allocation9 + $0x78] sm:$0xff]
          %693 = vmatprep.subr.mxu0 0.0
          %694 = vmatpush1.msra.mxu0 %v677
          %695 = vmatprep.subr.mxu0 0.0
          %696 = vmatpush1.msra.mxu0 %v678
          %697 = vmatprep.subr.mxu0 0.0
          %698 = vmatpush1.msra.mxu0 %v679
          %699 = vmatprep.subr.mxu0 0.0
          %700 = vmatpush1.msra.mxu0 %v680
          %701 = vmatprep.subr.mxu0 0.0
          %702 = vmatpush1.msra.mxu0 %v681
          %703 = vmatprep.subr.mxu0 0.0
          %704 = vmatpush1.msra.mxu0 %v682
          %705 = vmatprep.subr.mxu0 0.0
          %706 = vmatpush1.msra.mxu0 %v683
          %707 = vmatprep.subr.mxu0 0.0
          %708 = vmatpush1.msra.mxu0 %v684
          %709 = vmatprep.subr.mxu0 0.0
          %710 = vmatpush1.msra.mxu0 %v685
          %711 = vmatprep.subr.mxu0 0.0
          %712 = vmatpush1.msra.mxu0 %v686
          %713 = vmatprep.subr.mxu0 0.0
          %714 = vmatpush1.msra.mxu0 %v687
          %715 = vmatprep.subr.mxu0 0.0
          %716 = vmatpush1.msra.mxu0 %v688
          %717 = vmatprep.subr.mxu0 0.0
          %718 = vmatpush1.msra.mxu0 %v689
          %719 = vmatprep.subr.mxu0 0.0
          %720 = vmatpush1.msra.mxu0 %v690
          %721 = vmatprep.subr.mxu0 0.0
          %722 = vmatpush1.msra.mxu0 %v691
          %723 = vmatprep.subr.mxu0 0.0
          %724 = vmatpush1.msra.mxu0 %v692
          %725 = vmatprep.subr.mxu0 0.0
          %726 = vmatpush1.msra.mxu0 0.0
          %727 = vmatprep.subr.mxu0 0.0
          %728 = vmatpush1.msra.mxu0 0.0
          %729 = vmatprep.subr.mxu0 0.0
          %730 = vmatpush1.msra.mxu0 0.0
          %731 = vmatprep.subr.mxu0 0.0
          %732 = vmatpush1.msra.mxu0 0.0
          %733 = vmatprep.subr.mxu0 0.0
          %734 = vmatpush1.msra.mxu0 0.0
          %735 = vmatprep.subr.mxu0 0.0
          %736 = vmatpush1.msra.mxu0 0.0
          %737 = vmatprep.subr.mxu0 0.0
          %738 = vmatpush1.msra.mxu0 0.0
          %739 = vmatprep.subr.mxu0 0.0
          %740 = vmatpush1.msra.mxu0 0.0
          %741 = vmatprep.subr.mxu0 0.0
          %742 = vmatpush1.msra.mxu0 0.0
          %743 = vmatprep.subr.mxu0 0.0
          %744 = vmatpush1.msra.mxu0 0.0
          %745 = vmatprep.subr.mxu0 0.0
          %746 = vmatpush1.msra.mxu0 0.0
          %747 = vmatprep.subr.mxu0 0.0
          %748 = vmatpush1.msra.mxu0 0.0
          %749 = vmatprep.subr.mxu0 0.0
          %750 = vmatpush1.msra.mxu0 0.0
          %751 = vmatprep.subr.mxu0 0.0
          %752 = vmatpush1.msra.mxu0 0.0
          %753 = vmatprep.subr.mxu0 0.0
          %754 = vmatpush1.msra.mxu0 0.0
          %755 = vmatprep.subr.mxu0 0.0
          %756 = vmatpush1.msra.mxu0 0.0
          %757 = vmatprep.mubr.f32.mxu0 0.0
          %758 = vmatmul.mubr.f32.gmra.mrb[0].mxu0 %v668
          %v759 = vpop.f32.mrb[0].mxu0
          %v760 = vadd.f32 0.0, %v759
          %v761 = vpop.f32.mrb[0].mxu0
          %762 = vmatprep.mubr.f32.mxu0 0.0
          %763 = vmatmul.mubr.f32.gmra.mrb[0].mxu0 %v669
          %v764 = vpop.f32.mrb[0].mxu0
          %v765 = vadd.f32 0.0, %v764
          %v766 = vpop.f32.mrb[0].mxu0
          %767 = vdwg.mxu0
          %v768 = vadd.f32 %v675, %v760
          %v769 = vadd.f32 %v676, %v765
          %v770 = vtanh.pop %v768
          %v771 = vtanh.pop %v769
          %s772 = scalar_lea.vmem %s325, 16 [#allocation12]
          %773 = vst [vmem:[%s772] sm:$0xff] %v770
          %774 = vst [vmem:[%s772 + $0x8] sm:$0xff] %v771
          %s775 = sadd.s32 %s350, 2
          %s776 = smul.u32 %s775, 16
          %s777 = scalar_lea.vmem [#allocation2], %s776
          %v778 = vld [vmem:[%s777] sm:$0xff]
          %v779 = vld [vmem:[%s777 + $0x8] sm:$0xff]
          %v780 = vld [vmem:[#allocation9] sm:$0xff]
          %v781 = vld [vmem:[#allocation9 + $0x8] sm:$0xff]
          %v782 = vld [vmem:[#allocation9 + $0x10] sm:$0xff]
          %v783 = vld [vmem:[#allocation9 + $0x18] sm:$0xff]
          %v784 = vld [vmem:[#allocation9 + $0x20] sm:$0xff]
          %v785 = vld [vmem:[#allocation9 + $0x28] sm:$0xff]
          %v786 = vld [vmem:[#allocation9 + $0x30] sm:$0xff]
          %v787 = vld [vmem:[#allocation9 + $0x38] sm:$0xff]
          %v788 = vld [vmem:[#allocation9 + $0x40] sm:$0xff]
          %v789 = vld [vmem:[#allocation9 + $0x48] sm:$0xff]
          %v790 = vld [vmem:[#allocation9 + $0x50] sm:$0xff]
          %v791 = vld [vmem:[#allocation9 + $0x58] sm:$0xff]
          %v792 = vld [vmem:[#allocation9 + $0x60] sm:$0xff]
          %v793 = vld [vmem:[#allocation9 + $0x68] sm:$0xff]
          %v794 = vld [vmem:[#allocation9 + $0x70] sm:$0xff]
          %v795 = vld [vmem:[#allocation9 + $0x78] sm:$0xff]
          %796 = vmatprep.subr.mxu0 0.0
          %797 = vmatpush1.msra.mxu0 %v780
          %798 = vmatprep.subr.mxu0 0.0
          %799 = vmatpush1.msra.mxu0 %v781
          %800 = vmatprep.subr.mxu0 0.0
          %801 = vmatpush1.msra.mxu0 %v782
          %802 = vmatprep.subr.mxu0 0.0
          %803 = vmatpush1.msra.mxu0 %v783
          %804 = vmatprep.subr.mxu0 0.0
          %805 = vmatpush1.msra.mxu0 %v784
          %806 = vmatprep.subr.mxu0 0.0
          %807 = vmatpush1.msra.mxu0 %v785
          %808 = vmatprep.subr.mxu0 0.0
          %809 = vmatpush1.msra.mxu0 %v786
          %810 = vmatprep.subr.mxu0 0.0
          %811 = vmatpush1.msra.mxu0 %v787
          %812 = vmatprep.subr.mxu0 0.0
          %813 = vmatpush1.msra.mxu0 %v788
          %814 = vmatprep.subr.mxu0 0.0
          %815 = vmatpush1.msra.mxu0 %v789
          %816 = vmatprep.subr.mxu0 0.0
          %817 = vmatpush1.msra.mxu0 %v790
          %818 = vmatprep.subr.mxu0 0.0
          %819 = vmatpush1.msra.mxu0 %v791
          %820 = vmatprep.subr.mxu0 0.0
          %821 = vmatpush1.msra.mxu0 %v792
          %822 = vmatprep.subr.mxu0 0.0
          %823 = vmatpush1.msra.mxu0 %v793
          %824 = vmatprep.subr.mxu0 0.0
          %825 = vmatpush1.msra.mxu0 %v794
          %826 = vmatprep.subr.mxu0 0.0
          %827 = vmatpush1.msra.mxu0 %v795
          %828 = vmatprep.subr.mxu0 0.0
          %829 = vmatpush1.msra.mxu0 0.0
          %830 = vmatprep.subr.mxu0 0.0
          %831 = vmatpush1.msra.mxu0 0.0
          %832 = vmatprep.subr.mxu0 0.0
          %833 = vmatpush1.msra.mxu0 0.0
          %834 = vmatprep.subr.mxu0 0.0
          %835 = vmatpush1.msra.mxu0 0.0
          %836 = vmatprep.subr.mxu0 0.0
          %837 = vmatpush1.msra.mxu0 0.0
          %838 = vmatprep.subr.mxu0 0.0
          %839 = vmatpush1.msra.mxu0 0.0
          %840 = vmatprep.subr.mxu0 0.0
          %841 = vmatpush1.msra.mxu0 0.0
          %842 = vmatprep.subr.mxu0 0.0
          %843 = vmatpush1.msra.mxu0 0.0
          %844 = vmatprep.subr.mxu0 0.0
          %845 = vmatpush1.msra.mxu0 0.0
          %846 = vmatprep.subr.mxu0 0.0
          %847 = vmatpush1.msra.mxu0 0.0
          %848 = vmatprep.subr.mxu0 0.0
          %849 = vmatpush1.msra.mxu0 0.0
          %850 = vmatprep.subr.mxu0 0.0
          %851 = vmatpush1.msra.mxu0 0.0
          %852 = vmatprep.subr.mxu0 0.0
          %853 = vmatpush1.msra.mxu0 0.0
          %854 = vmatprep.subr.mxu0 0.0
          %855 = vmatpush1.msra.mxu0 0.0
          %856 = vmatprep.subr.mxu0 0.0
          %857 = vmatpush1.msra.mxu0 0.0
          %858 = vmatprep.subr.mxu0 0.0
          %859 = vmatpush1.msra.mxu0 0.0
          %860 = vmatprep.mubr.f32.mxu0 0.0
          %861 = vmatmul.mubr.f32.gmra.mrb[0].mxu0 %v770
          %v862 = vpop.f32.mrb[0].mxu0
          %v863 = vadd.f32 0.0, %v862
          %v864 = vpop.f32.mrb[0].mxu0
          %865 = vmatprep.mubr.f32.mxu0 0.0
          %866 = vmatmul.mubr.f32.gmra.mrb[0].mxu0 %v771
          %v867 = vpop.f32.mrb[0].mxu0
          %v868 = vadd.f32 0.0, %v867
          %v869 = vpop.f32.mrb[0].mxu0
          %870 = vdwg.mxu0
          %v871 = vadd.f32 %v778, %v863
          %v872 = vadd.f32 %v779, %v868
          %v873 = vtanh.pop %v871
          %v874 = vtanh.pop %v872
          %s875 = scalar_lea.vmem %s325, 32 [#allocation12]
          %876 = vst [vmem:[%s875] sm:$0xff] %v873
          %877 = vst [vmem:[%s875 + $0x8] sm:$0xff] %v874
          %s878 = sadd.s32 %s350, 3
          %s879 = smul.u32 %s878, 16
          %s880 = scalar_lea.vmem [#allocation2], %s879
          %v881 = vld [vmem:[%s880] sm:$0xff]
          %v882 = vld [vmem:[%s880 + $0x8] sm:$0xff]
          %v883 = vld [vmem:[#allocation9] sm:$0xff]
          %v884 = vld [vmem:[#allocation9 + $0x8] sm:$0xff]
          %v885 = vld [vmem:[#allocation9 + $0x10] sm:$0xff]
          %v886 = vld [vmem:[#allocation9 + $0x18] sm:$0xff]
          %v887 = vld [vmem:[#allocation9 + $0x20] sm:$0xff]
          %v888 = vld [vmem:[#allocation9 + $0x28] sm:$0xff]
          %v889 = vld [vmem:[#allocation9 + $0x30] sm:$0xff]
          %v890 = vld [vmem:[#allocation9 + $0x38] sm:$0xff]
          %v891 = vld [vmem:[#allocation9 + $0x40] sm:$0xff]
          %v892 = vld [vmem:[#allocation9 + $0x48] sm:$0xff]
          %v893 = vld [vmem:[#allocation9 + $0x50] sm:$0xff]
          %v894 = vld [vmem:[#allocation9 + $0x58] sm:$0xff]
          %v895 = vld [vmem:[#allocation9 + $0x60] sm:$0xff]
          %v896 = vld [vmem:[#allocation9 + $0x68] sm:$0xff]
          %v897 = vld [vmem:[#allocation9 + $0x70] sm:$0xff]
          %v898 = vld [vmem:[#allocation9 + $0x78] sm:$0xff]
          %899 = vmatprep.subr.mxu0 0.0
          %900 = vmatpush1.msra.mxu0 %v883
          %901 = vmatprep.subr.mxu0 0.0
          %902 = vmatpush1.msra.mxu0 %v884
          %903 = vmatprep.subr.mxu0 0.0
          %904 = vmatpush1.msra.mxu0 %v885
          %905 = vmatprep.subr.mxu0 0.0
          %906 = vmatpush1.msra.mxu0 %v886
          %907 = vmatprep.subr.mxu0 0.0
          %908 = vmatpush1.msra.mxu0 %v887
          %909 = vmatprep.subr.mxu0 0.0
          %910 = vmatpush1.msra.mxu0 %v888
          %911 = vmatprep.subr.mxu0 0.0
          %912 = vmatpush1.msra.mxu0 %v889
          %913 = vmatprep.subr.mxu0 0.0
          %914 = vmatpush1.msra.mxu0 %v890
          %915 = vmatprep.subr.mxu0 0.0
          %916 = vmatpush1.msra.mxu0 %v891
          %917 = vmatprep.subr.mxu0 0.0
          %918 = vmatpush1.msra.mxu0 %v892
          %919 = vmatprep.subr.mxu0 0.0
          %920 = vmatpush1.msra.mxu0 %v893
          %921 = vmatprep.subr.mxu0 0.0
          %922 = vmatpush1.msra.mxu0 %v894
          %923 = vmatprep.subr.mxu0 0.0
          %924 = vmatpush1.msra.mxu0 %v895
          %925 = vmatprep.subr.mxu0 0.0
          %926 = vmatpush1.msra.mxu0 %v896
          %927 = vmatprep.subr.mxu0 0.0
          %928 = vmatpush1.msra.mxu0 %v897
          %929 = vmatprep.subr.mxu0 0.0
          %930 = vmatpush1.msra.mxu0 %v898
          %931 = vmatprep.subr.mxu0 0.0
          %932 = vmatpush1.msra.mxu0 0.0
          %933 = vmatprep.subr.mxu0 0.0
          %934 = vmatpush1.msra.mxu0 0.0
          %935 = vmatprep.subr.mxu0 0.0
          %936 = vmatpush1.msra.mxu0 0.0
          %937 = vmatprep.subr.mxu0 0.0
          %938 = vmatpush1.msra.mxu0 0.0
          %939 = vmatprep.subr.mxu0 0.0
          %940 = vmatpush1.msra.mxu0 0.0
          %941 = vmatprep.subr.mxu0 0.0
          %942 = vmatpush1.msra.mxu0 0.0
          %943 = vmatprep.subr.mxu0 0.0
          %944 = vmatpush1.msra.mxu0 0.0
          %945 = vmatprep.subr.mxu0 0.0
          %946 = vmatpush1.msra.mxu0 0.0
          %947 = vmatprep.subr.mxu0 0.0
          %948 = vmatpush1.msra.mxu0 0.0
          %949 = vmatprep.subr.mxu0 0.0
          %950 = vmatpush1.msra.mxu0 0.0
          %951 = vmatprep.subr.mxu0 0.0
          %952 = vmatpush1.msra.mxu0 0.0
          %953 = vmatprep.subr.mxu0 0.0
          %954 = vmatpush1.msra.mxu0 0.0
          %955 = vmatprep.subr.mxu0 0.0
          %956 = vmatpush1.msra.mxu0 0.0
          %957 = vmatprep.subr.mxu0 0.0
          %958 = vmatpush1.msra.mxu0 0.0
          %959 = vmatprep.subr.mxu0 0.0
          %960 = vmatpush1.msra.mxu0 0.0
          %961 = vmatprep.subr.mxu0 0.0
          %962 = vmatpush1.msra.mxu0 0.0
          %963 = vmatprep.mubr.f32.mxu0 0.0
          %964 = vmatmul.mubr.f32.gmra.mrb[0].mxu0 %v873
          %v965 = vpop.f32.mrb[0].mxu0
          %v966 = vadd.f32 0.0, %v965
          %v967 = vpop.f32.mrb[0].mxu0
          %968 = vmatprep.mubr.f32.mxu0 0.0
          %969 = vmatmul.mubr.f32.gmra.mrb[0].mxu0 %v874
          %v970 = vpop.f32.mrb[0].mxu0
          %v971 = vadd.f32 0.0, %v970
          %v972 = vpop.f32.mrb[0].mxu0
          %973 = vdwg.mxu0
          %v974 = vadd.f32 %v881, %v966
          %v975 = vadd.f32 %v882, %v971
          %v976 = vtanh.pop %v974
          %v977 = vtanh.pop %v975
          %s978 = scalar_lea.vmem %s325, 48 [#allocation12]
          %979 = vst [vmem:[%s978] sm:$0xff] %v976
          %980 = vst [vmem:[%s978 + $0x8] sm:$0xff] %v977
          %s981 = sadd.s32 %s350, 4
          %s982 = smul.u32 %s981, 16
          %s983 = scalar_lea.vmem [#allocation2], %s982
          %v984 = vld [vmem:[%s983] sm:$0xff]
          %v985 = vld [vmem:[%s983 + $0x8] sm:$0xff]
          %v986 = vld [vmem:[#allocation9] sm:$0xff]
          %v987 = vld [vmem:[#allocation9 + $0x8] sm:$0xff]
          %v988 = vld [vmem:[#allocation9 + $0x10] sm:$0xff]
          %v989 = vld [vmem:[#allocation9 + $0x18] sm:$0xff]
          %v990 = vld [vmem:[#allocation9 + $0x20] sm:$0xff]
          %v991 = vld [vmem:[#allocation9 + $0x28] sm:$0xff]
          %v992 = vld [vmem:[#allocation9 + $0x30] sm:$0xff]
          %v993 = vld [vmem:[#allocation9 + $0x38] sm:$0xff]
          %v994 = vld [vmem:[#allocation9 + $0x40] sm:$0xff]
          %v995 = vld [vmem:[#allocation9 + $0x48] sm:$0xff]
          %v996 = vld [vmem:[#allocation9 + $0x50] sm:$0xff]
          %v997 = vld [vmem:[#allocation9 + $0x58] sm:$0xff]
          %v998 = vld [vmem:[#allocation9 + $0x60] sm:$0xff]
          %v999 = vld [vmem:[#allocation9 + $0x68] sm:$0xff]
          %v1000 = vld [vmem:[#allocation9 + $0x70] sm:$0xff]
          %v1001 = vld [vmem:[#allocation9 + $0x78] sm:$0xff]
          %1002 = vmatprep.subr.mxu0 0.0
          %1003 = vmatpush1.msra.mxu0 %v986
          %1004 = vmatprep.subr.mxu0 0.0
          %1005 = vmatpush1.msra.mxu0 %v987
          %1006 = vmatprep.subr.mxu0 0.0
          %1007 = vmatpush1.msra.mxu0 %v988
          %1008 = vmatprep.subr.mxu0 0.0
          %1009 = vmatpush1.msra.mxu0 %v989
          %1010 = vmatprep.subr.mxu0 0.0
          %1011 = vmatpush1.msra.mxu0 %v990
          %1012 = vmatprep.subr.mxu0 0.0
          %1013 = vmatpush1.msra.mxu0 %v991
          %1014 = vmatprep.subr.mxu0 0.0
          %1015 = vmatpush1.msra.mxu0 %v992
          %1016 = vmatprep.subr.mxu0 0.0
          %1017 = vmatpush1.msra.mxu0 %v993
          %1018 = vmatprep.subr.mxu0 0.0
          %1019 = vmatpush1.msra.mxu0 %v994
          %1020 = vmatprep.subr.mxu0 0.0
          %1021 = vmatpush1.msra.mxu0 %v995
          %1022 = vmatprep.subr.mxu0 0.0
          %1023 = vmatpush1.msra.mxu0 %v996
          %1024 = vmatprep.subr.mxu0 0.0
          %1025 = vmatpush1.msra.mxu0 %v997
          %1026 = vmatprep.subr.mxu0 0.0
          %1027 = vmatpush1.msra.mxu0 %v998
          %1028 = vmatprep.subr.mxu0 0.0
          %1029 = vmatpush1.msra.mxu0 %v999
          %1030 = vmatprep.subr.mxu0 0.0
          %1031 = vmatpush1.msra.mxu0 %v1000
          %1032 = vmatprep.subr.mxu0 0.0
          %1033 = vmatpush1.msra.mxu0 %v1001
          %1034 = vmatprep.subr.mxu0 0.0
          %1035 = vmatpush1.msra.mxu0 0.0
          %1036 = vmatprep.subr.mxu0 0.0
          %1037 = vmatpush1.msra.mxu0 0.0
          %1038 = vmatprep.subr.mxu0 0.0
          %1039 = vmatpush1.msra.mxu0 0.0
          %1040 = vmatprep.subr.mxu0 0.0
          %1041 = vmatpush1.msra.mxu0 0.0
          %1042 = vmatprep.subr.mxu0 0.0
          %1043 = vmatpush1.msra.mxu0 0.0
          %1044 = vmatprep.subr.mxu0 0.0
          %1045 = vmatpush1.msra.mxu0 0.0
          %1046 = vmatprep.subr.mxu0 0.0
          %1047 = vmatpush1.msra.mxu0 0.0
          %1048 = vmatprep.subr.mxu0 0.0
          %1049 = vmatpush1.msra.mxu0 0.0
          %1050 = vmatprep.subr.mxu0 0.0
          %1051 = vmatpush1.msra.mxu0 0.0
          %1052 = vmatprep.subr.mxu0 0.0
          %1053 = vmatpush1.msra.mxu0 0.0
          %1054 = vmatprep.subr.mxu0 0.0
          %1055 = vmatpush1.msra.mxu0 0.0
          %1056 = vmatprep.subr.mxu0 0.0
          %1057 = vmatpush1.msra.mxu0 0.0
          %1058 = vmatprep.subr.mxu0 0.0
          %1059 = vmatpush1.msra.mxu0 0.0
          %1060 = vmatprep.subr.mxu0 0.0
          %1061 = vmatpush1.msra.mxu0 0.0
          %1062 = vmatprep.subr.mxu0 0.0
          %1063 = vmatpush1.msra.mxu0 0.0
          %1064 = vmatprep.subr.mxu0 0.0
          %1065 = vmatpush1.msra.mxu0 0.0
          %1066 = vmatprep.mubr.f32.mxu0 0.0
          %1067 = vmatmul.mubr.f32.gmra.mrb[0].mxu0 %v976
          %v1068 = vpop.f32.mrb[0].mxu0
          %v1069 = vadd.f32 0.0, %v1068
          %v1070 = vpop.f32.mrb[0].mxu0
          %1071 = vmatprep.mubr.f32.mxu0 0.0
          %1072 = vmatmul.mubr.f32.gmra.mrb[0].mxu0 %v977
          %v1073 = vpop.f32.mrb[0].mxu0
          %v1074 = vadd.f32 0.0, %v1073
          %v1075 = vpop.f32.mrb[0].mxu0
          %1076 = vdwg.mxu0
          %v1077 = vadd.f32 %v984, %v1069
          %v1078 = vadd.f32 %v985, %v1074
          %v1079 = vtanh.pop %v1077
          %v1080 = vtanh.pop %v1078
          %s1081 = scalar_lea.vmem %s325, 64 [#allocation12]
          %1082 = vst [vmem:[%s1081] sm:$0xff] %v1079
          %1083 = vst [vmem:[%s1081 + $0x8] sm:$0xff] %v1080
          %s1084 = sadd.s32 %s350, 5
          %s1085 = smul.u32 %s1084, 16
          %s1086 = scalar_lea.vmem [#allocation2], %s1085
          %v1087 = vld [vmem:[%s1086] sm:$0xff]
          %v1088 = vld [vmem:[%s1086 + $0x8] sm:$0xff]
          %v1089 = vld [vmem:[#allocation9] sm:$0xff]
          %v1090 = vld [vmem:[#allocation9 + $0x8] sm:$0xff]
          %v1091 = vld [vmem:[#allocation9 + $0x10] sm:$0xff]
          %v1092 = vld [vmem:[#allocation9 + $0x18] sm:$0xff]
          %v1093 = vld [vmem:[#allocation9 + $0x20] sm:$0xff]
          %v1094 = vld [vmem:[#allocation9 + $0x28] sm:$0xff]
          %v1095 = vld [vmem:[#allocation9 + $0x30] sm:$0xff]
          %v1096 = vld [vmem:[#allocation9 + $0x38] sm:$0xff]
          %v1097 = vld [vmem:[#allocation9 + $0x40] sm:$0xff]
          %v1098 = vld [vmem:[#allocation9 + $0x48] sm:$0xff]
          %v1099 = vld [vmem:[#allocation9 + $0x50] sm:$0xff]
          %v1100 = vld [vmem:[#allocation9 + $0x58] sm:$0xff]
          %v1101 = vld [vmem:[#allocation9 + $0x60] sm:$0xff]
          %v1102 = vld [vmem:[#allocation9 + $0x68] sm:$0xff]
          %v1103 = vld [vmem:[#allocation9 + $0x70] sm:$0xff]
          %v1104 = vld [vmem:[#allocation9 + $0x78] sm:$0xff]
          %1105 = vmatprep.subr.mxu0 0.0
          %1106 = vmatpush1.msra.mxu0 %v1089
          %1107 = vmatprep.subr.mxu0 0.0
          %1108 = vmatpush1.msra.mxu0 %v1090
          %1109 = vmatprep.subr.mxu0 0.0
          %1110 = vmatpush1.msra.mxu0 %v1091
          %1111 = vmatprep.subr.mxu0 0.0
          %1112 = vmatpush1.msra.mxu0 %v1092
          %1113 = vmatprep.subr.mxu0 0.0
          %1114 = vmatpush1.msra.mxu0 %v1093
          %1115 = vmatprep.subr.mxu0 0.0
          %1116 = vmatpush1.msra.mxu0 %v1094
          %1117 = vmatprep.subr.mxu0 0.0
          %1118 = vmatpush1.msra.mxu0 %v1095
          %1119 = vmatprep.subr.mxu0 0.0
          %1120 = vmatpush1.msra.mxu0 %v1096
          %1121 = vmatprep.subr.mxu0 0.0
          %1122 = vmatpush1.msra.mxu0 %v1097
          %1123 = vmatprep.subr.mxu0 0.0
          %1124 = vmatpush1.msra.mxu0 %v1098
          %1125 = vmatprep.subr.mxu0 0.0
          %1126 = vmatpush1.msra.mxu0 %v1099
          %1127 = vmatprep.subr.mxu0 0.0
          %1128 = vmatpush1.msra.mxu0 %v1100
          %1129 = vmatprep.subr.mxu0 0.0
          %1130 = vmatpush1.msra.mxu0 %v1101
          %1131 = vmatprep.subr.mxu0 0.0
          %1132 = vmatpush1.msra.mxu0 %v1102
          %1133 = vmatprep.subr.mxu0 0.0
          %1134 = vmatpush1.msra.mxu0 %v1103
          %1135 = vmatprep.subr.mxu0 0.0
          %1136 = vmatpush1.msra.mxu0 %v1104
          %1137 = vmatprep.subr.mxu0 0.0
          %1138 = vmatpush1.msra.mxu0 0.0
          %1139 = vmatprep.subr.mxu0 0.0
          %1140 = vmatpush1.msra.mxu0 0.0
          %1141 = vmatprep.subr.mxu0 0.0
          %1142 = vmatpush1.msra.mxu0 0.0
          %1143 = vmatprep.subr.mxu0 0.0
          %1144 = vmatpush1.msra.mxu0 0.0
          %1145 = vmatprep.subr.mxu0 0.0
          %1146 = vmatpush1.msra.mxu0 0.0
          %1147 = vmatprep.subr.mxu0 0.0
          %1148 = vmatpush1.msra.mxu0 0.0
          %1149 = vmatprep.subr.mxu0 0.0
          %1150 = vmatpush1.msra.mxu0 0.0
          %1151 = vmatprep.subr.mxu0 0.0
          %1152 = vmatpush1.msra.mxu0 0.0
          %1153 = vmatprep.subr.mxu0 0.0
          %1154 = vmatpush1.msra.mxu0 0.0
          %1155 = vmatprep.subr.mxu0 0.0
          %1156 = vmatpush1.msra.mxu0 0.0
          %1157 = vmatprep.subr.mxu0 0.0
          %1158 = vmatpush1.msra.mxu0 0.0
          %1159 = vmatprep.subr.mxu0 0.0
          %1160 = vmatpush1.msra.mxu0 0.0
          %1161 = vmatprep.subr.mxu0 0.0
          %1162 = vmatpush1.msra.mxu0 0.0
          %1163 = vmatprep.subr.mxu0 0.0
          %1164 = vmatpush1.msra.mxu0 0.0
          %1165 = vmatprep.subr.mxu0 0.0
          %1166 = vmatpush1.msra.mxu0 0.0
          %1167 = vmatprep.subr.mxu0 0.0
          %1168 = vmatpush1.msra.mxu0 0.0
          %1169 = vmatprep.mubr.f32.mxu0 0.0
          %1170 = vmatmul.mubr.f32.gmra.mrb[0].mxu0 %v1079
          %v1171 = vpop.f32.mrb[0].mxu0
          %v1172 = vadd.f32 0.0, %v1171
          %v1173 = vpop.f32.mrb[0].mxu0
          %1174 = vmatprep.mubr.f32.mxu0 0.0
          %1175 = vmatmul.mubr.f32.gmra.mrb[0].mxu0 %v1080
          %v1176 = vpop.f32.mrb[0].mxu0
          %v1177 = vadd.f32 0.0, %v1176
          %v1178 = vpop.f32.mrb[0].mxu0
          %1179 = vdwg.mxu0
          %v1180 = vadd.f32 %v1087, %v1172
          %v1181 = vadd.f32 %v1088, %v1177
          %v1182 = vtanh.pop %v1180
          %v1183 = vtanh.pop %v1181
          %s1184 = scalar_lea.vmem %s325, 80 [#allocation12]
          %1185 = vst [vmem:[%s1184] sm:$0xff] %v1182
          %1186 = vst [vmem:[%s1184 + $0x8] sm:$0xff] %v1183
          %s1187 = sadd.s32 %s350, 6
          %s1188 = smul.u32 %s1187, 16
          %s1189 = scalar_lea.vmem [#allocation2], %s1188
          %v1190 = vld [vmem:[%s1189] sm:$0xff]
          %v1191 = vld [vmem:[%s1189 + $0x8] sm:$0xff]
          %v1192 = vld [vmem:[#allocation9] sm:$0xff]
          %v1193 = vld [vmem:[#allocation9 + $0x8] sm:$0xff]
          %v1194 = vld [vmem:[#allocation9 + $0x10] sm:$0xff]
          %v1195 = vld [vmem:[#allocation9 + $0x18] sm:$0xff]
          %v1196 = vld [vmem:[#allocation9 + $0x20] sm:$0xff]
          %v1197 = vld [vmem:[#allocation9 + $0x28] sm:$0xff]
          %v1198 = vld [vmem:[#allocation9 + $0x30] sm:$0xff]
          %v1199 = vld [vmem:[#allocation9 + $0x38] sm:$0xff]
          %v1200 = vld [vmem:[#allocation9 + $0x40] sm:$0xff]
          %v1201 = vld [vmem:[#allocation9 + $0x48] sm:$0xff]
          %v1202 = vld [vmem:[#allocation9 + $0x50] sm:$0xff]
          %v1203 = vld [vmem:[#allocation9 + $0x58] sm:$0xff]
          %v1204 = vld [vmem:[#allocation9 + $0x60] sm:$0xff]
          %v1205 = vld [vmem:[#allocation9 + $0x68] sm:$0xff]
          %v1206 = vld [vmem:[#allocation9 + $0x70] sm:$0xff]
          %v1207 = vld [vmem:[#allocation9 + $0x78] sm:$0xff]
          %1208 = vmatprep.subr.mxu0 0.0
          %1209 = vmatpush1.msra.mxu0 %v1192
          %1210 = vmatprep.subr.mxu0 0.0
          %1211 = vmatpush1.msra.mxu0 %v1193
          %1212 = vmatprep.subr.mxu0 0.0
          %1213 = vmatpush1.msra.mxu0 %v1194
          %1214 = vmatprep.subr.mxu0 0.0
          %1215 = vmatpush1.msra.mxu0 %v1195
          %1216 = vmatprep.subr.mxu0 0.0
          %1217 = vmatpush1.msra.mxu0 %v1196
          %1218 = vmatprep.subr.mxu0 0.0
          %1219 = vmatpush1.msra.mxu0 %v1197
          %1220 = vmatprep.subr.mxu0 0.0
          %1221 = vmatpush1.msra.mxu0 %v1198
          %1222 = vmatprep.subr.mxu0 0.0
          %1223 = vmatpush1.msra.mxu0 %v1199
          %1224 = vmatprep.subr.mxu0 0.0
          %1225 = vmatpush1.msra.mxu0 %v1200
          %1226 = vmatprep.subr.mxu0 0.0
          %1227 = vmatpush1.msra.mxu0 %v1201
          %1228 = vmatprep.subr.mxu0 0.0
          %1229 = vmatpush1.msra.mxu0 %v1202
          %1230 = vmatprep.subr.mxu0 0.0
          %1231 = vmatpush1.msra.mxu0 %v1203
          %1232 = vmatprep.subr.mxu0 0.0
          %1233 = vmatpush1.msra.mxu0 %v1204
          %1234 = vmatprep.subr.mxu0 0.0
          %1235 = vmatpush1.msra.mxu0 %v1205
          %1236 = vmatprep.subr.mxu0 0.0
          %1237 = vmatpush1.msra.mxu0 %v1206
          %1238 = vmatprep.subr.mxu0 0.0
          %1239 = vmatpush1.msra.mxu0 %v1207
          %1240 = vmatprep.subr.mxu0 0.0
          %1241 = vmatpush1.msra.mxu0 0.0
          %1242 = vmatprep.subr.mxu0 0.0
          %1243 = vmatpush1.msra.mxu0 0.0
          %1244 = vmatprep.subr.mxu0 0.0
          %1245 = vmatpush1.msra.mxu0 0.0
          %1246 = vmatprep.subr.mxu0 0.0
          %1247 = vmatpush1.msra.mxu0 0.0
          %1248 = vmatprep.subr.mxu0 0.0
          %1249 = vmatpush1.msra.mxu0 0.0
          %1250 = vmatprep.subr.mxu0 0.0
          %1251 = vmatpush1.msra.mxu0 0.0
          %1252 = vmatprep.subr.mxu0 0.0
          %1253 = vmatpush1.msra.mxu0 0.0
          %1254 = vmatprep.subr.mxu0 0.0
          %1255 = vmatpush1.msra.mxu0 0.0
          %1256 = vmatprep.subr.mxu0 0.0
          %1257 = vmatpush1.msra.mxu0 0.0
          %1258 = vmatprep.subr.mxu0 0.0
          %1259 = vmatpush1.msra.mxu0 0.0
          %1260 = vmatprep.subr.mxu0 0.0
          %1261 = vmatpush1.msra.mxu0 0.0
          %1262 = vmatprep.subr.mxu0 0.0
          %1263 = vmatpush1.msra.mxu0 0.0
          %1264 = vmatprep.subr.mxu0 0.0
          %1265 = vmatpush1.msra.mxu0 0.0
          %1266 = vmatprep.subr.mxu0 0.0
          %1267 = vmatpush1.msra.mxu0 0.0
          %1268 = vmatprep.subr.mxu0 0.0
          %1269 = vmatpush1.msra.mxu0 0.0
          %1270 = vmatprep.subr.mxu0 0.0
          %1271 = vmatpush1.msra.mxu0 0.0
          %1272 = vmatprep.mubr.f32.mxu0 0.0
          %1273 = vmatmul.mubr.f32.gmra.mrb[0].mxu0 %v1182
          %v1274 = vpop.f32.mrb[0].mxu0
          %v1275 = vadd.f32 0.0, %v1274
          %v1276 = vpop.f32.mrb[0].mxu0
          %1277 = vmatprep.mubr.f32.mxu0 0.0
          %1278 = vmatmul.mubr.f32.gmra.mrb[0].mxu0 %v1183
          %v1279 = vpop.f32.mrb[0].mxu0
          %v1280 = vadd.f32 0.0, %v1279
          %v1281 = vpop.f32.mrb[0].mxu0
          %1282 = vdwg.mxu0
          %v1283 = vadd.f32 %v1190, %v1275
          %v1284 = vadd.f32 %v1191, %v1280
          %v1285 = vtanh.pop %v1283
          %v1286 = vtanh.pop %v1284
          %s1287 = scalar_lea.vmem %s325, 96 [#allocation12]
          %1288 = vst [vmem:[%s1287] sm:$0xff] %v1285
          %1289 = vst [vmem:[%s1287 + $0x8] sm:$0xff] %v1286
          %s1290 = sadd.s32 %s350, 7
          %s1291 = smul.u32 %s1290, 16
          %s1292 = scalar_lea.vmem [#allocation2], %s1291
          %v1293 = vld [vmem:[%s1292] sm:$0xff]
          %v1294 = vld [vmem:[%s1292 + $0x8] sm:$0xff]
          %v1295 = vld [vmem:[#allocation9] sm:$0xff]
          %v1296 = vld [vmem:[#allocation9 + $0x8] sm:$0xff]
          %v1297 = vld [vmem:[#allocation9 + $0x10] sm:$0xff]
          %v1298 = vld [vmem:[#allocation9 + $0x18] sm:$0xff]
          %v1299 = vld [vmem:[#allocation9 + $0x20] sm:$0xff]
          %v1300 = vld [vmem:[#allocation9 + $0x28] sm:$0xff]
          %v1301 = vld [vmem:[#allocation9 + $0x30] sm:$0xff]
          %v1302 = vld [vmem:[#allocation9 + $0x38] sm:$0xff]
          %v1303 = vld [vmem:[#allocation9 + $0x40] sm:$0xff]
          %v1304 = vld [vmem:[#allocation9 + $0x48] sm:$0xff]
          %v1305 = vld [vmem:[#allocation9 + $0x50] sm:$0xff]
          %v1306 = vld [vmem:[#allocation9 + $0x58] sm:$0xff]
          %v1307 = vld [vmem:[#allocation9 + $0x60] sm:$0xff]
          %v1308 = vld [vmem:[#allocation9 + $0x68] sm:$0xff]
          %v1309 = vld [vmem:[#allocation9 + $0x70] sm:$0xff]
          %v1310 = vld [vmem:[#allocation9 + $0x78] sm:$0xff]
          %1311 = vmatprep.subr.mxu0 0.0
          %1312 = vmatpush1.msra.mxu0 %v1295
          %1313 = vmatprep.subr.mxu0 0.0
          %1314 = vmatpush1.msra.mxu0 %v1296
          %1315 = vmatprep.subr.mxu0 0.0
          %1316 = vmatpush1.msra.mxu0 %v1297
          %1317 = vmatprep.subr.mxu0 0.0
          %1318 = vmatpush1.msra.mxu0 %v1298
          %1319 = vmatprep.subr.mxu0 0.0
          %1320 = vmatpush1.msra.mxu0 %v1299
          %1321 = vmatprep.subr.mxu0 0.0
          %1322 = vmatpush1.msra.mxu0 %v1300
          %1323 = vmatprep.subr.mxu0 0.0
          %1324 = vmatpush1.msra.mxu0 %v1301
          %1325 = vmatprep.subr.mxu0 0.0
          %1326 = vmatpush1.msra.mxu0 %v1302
          %1327 = vmatprep.subr.mxu0 0.0
          %1328 = vmatpush1.msra.mxu0 %v1303
          %1329 = vmatprep.subr.mxu0 0.0
          %1330 = vmatpush1.msra.mxu0 %v1304
          %1331 = vmatprep.subr.mxu0 0.0
          %1332 = vmatpush1.msra.mxu0 %v1305
          %1333 = vmatprep.subr.mxu0 0.0
          %1334 = vmatpush1.msra.mxu0 %v1306
          %1335 = vmatprep.subr.mxu0 0.0
          %1336 = vmatpush1.msra.mxu0 %v1307
          %1337 = vmatprep.subr.mxu0 0.0
          %1338 = vmatpush1.msra.mxu0 %v1308
          %1339 = vmatprep.subr.mxu0 0.0
          %1340 = vmatpush1.msra.mxu0 %v1309
          %1341 = vmatprep.subr.mxu0 0.0
          %1342 = vmatpush1.msra.mxu0 %v1310
          %1343 = vmatprep.subr.mxu0 0.0
          %1344 = vmatpush1.msra.mxu0 0.0
          %1345 = vmatprep.subr.mxu0 0.0
          %1346 = vmatpush1.msra.mxu0 0.0
          %1347 = vmatprep.subr.mxu0 0.0
          %1348 = vmatpush1.msra.mxu0 0.0
          %1349 = vmatprep.subr.mxu0 0.0
          %1350 = vmatpush1.msra.mxu0 0.0
          %1351 = vmatprep.subr.mxu0 0.0
          %1352 = vmatpush1.msra.mxu0 0.0
          %1353 = vmatprep.subr.mxu0 0.0
          %1354 = vmatpush1.msra.mxu0 0.0
          %1355 = vmatprep.subr.mxu0 0.0
          %1356 = vmatpush1.msra.mxu0 0.0
          %1357 = vmatprep.subr.mxu0 0.0
          %1358 = vmatpush1.msra.mxu0 0.0
          %1359 = vmatprep.subr.mxu0 0.0
          %1360 = vmatpush1.msra.mxu0 0.0
          %1361 = vmatprep.subr.mxu0 0.0
          %1362 = vmatpush1.msra.mxu0 0.0
          %1363 = vmatprep.subr.mxu0 0.0
          %1364 = vmatpush1.msra.mxu0 0.0
          %1365 = vmatprep.subr.mxu0 0.0
          %1366 = vmatpush1.msra.mxu0 0.0
          %1367 = vmatprep.subr.mxu0 0.0
          %1368 = vmatpush1.msra.mxu0 0.0
          %1369 = vmatprep.subr.mxu0 0.0
          %1370 = vmatpush1.msra.mxu0 0.0
          %1371 = vmatprep.subr.mxu0 0.0
          %1372 = vmatpush1.msra.mxu0 0.0
          %1373 = vmatprep.subr.mxu0 0.0
          %1374 = vmatpush1.msra.mxu0 0.0
          %1375 = vmatprep.mubr.f32.mxu0 0.0
          %1376 = vmatmul.mubr.f32.gmra.mrb[0].mxu0 %v1285
          %v1377 = vpop.f32.mrb[0].mxu0
          %v1378 = vadd.f32 0.0, %v1377
          %v1379 = vpop.f32.mrb[0].mxu0
          %1380 = vmatprep.mubr.f32.mxu0 0.0
          %1381 = vmatmul.mubr.f32.gmra.mrb[0].mxu0 %v1286
          %v1382 = vpop.f32.mrb[0].mxu0
          %v1383 = vadd.f32 0.0, %v1382
          %v1384 = vpop.f32.mrb[0].mxu0
          %1385 = vdwg.mxu0
          %v1386 = vadd.f32 %v1293, %v1378
          %v1387 = vadd.f32 %v1294, %v1383
          %v1388 = vtanh.pop %v1386
          %v1389 = vtanh.pop %v1387
          %s1390 = scalar_lea.vmem %s325, 112 [#allocation12]
          %1391 = vst [vmem:[%s1390] sm:$0xff] %v1388
          %1392 = vst [vmem:[%s1390 + $0x8] sm:$0xff] %v1389
          %1393 = vst [vmem:[#allocation3] sm:$0xff] %v1388
          %1394 = vst [vmem:[#allocation3 + $0x8] sm:$0xff] %v1389
        $region68: #{tpu_custom_call.1} parent=39 // pred_fallthru
          _
        %s1395 = sand.u32 %s173, 1
        %s1396 = scalar_lea.sflag [#allocation6], %s1395
        %s1397 = sand.u32 %s173, 1
        %s1398 = smul.addr %s1397, 128
        %s1399 = scalar_lea.vmem [#allocation12], %s1398
        // Predicated region
        $region69: #{tpu_custom_call.1} parent=39 // pred_check
          %p1400 = pneg %p183
        $region70: #{tpu_custom_call.1} parent=39 // pred_check_branch
          %1402 = sbr.rel (%p1400) target = $region72
        $region71: #{tpu_custom_call.1} parent=39 // pred_region
          %s1403 = ssub.s32 %s29, 1
          %p1404 = scmp.gt.s32.totalorder %s1403, 0
          %s1405 = scalar_select %p1404, %s1403, 0
          %s1406 = smul.u32 8, %s1405
          %s1407 = smul.u32 2, %s28
          %s1409 = ssub.s32 2048, 2048
          %1410 = vsyncadd %s1396, %s1409
          %s1411 = smul.addr %s1406, 2
          %s1412 = sadd.s32 %s1407, %s1411
          %s1413 = smul.addr %s1412, 128
          %s1414 = scalar_lea.hbm %s5, %s1413
          %s1415 = sshll.u32 %s1399, 4
          %s1416 = int_to_ptr.vmem [resolvable:$true] %s1415
          %1421 = dma.vmem_to_hbm [thread:$0]  %s1416, 2048, %s1414, %s1396, 128, 128, 8
        $region72: #{tpu_custom_call.1} parent=39 // pred_fallthru
          _
      $region40: #{tpu_custom_call.1} parent=5 // pred_fallthru
        _
      %p1422 = scmp.le.s32.totalorder 2, %s19
      // Predicated region
      $region73: #{tpu_custom_call.1} parent=5 // pred_check
        %p1423 = pneg %p1422
      $region74: #{tpu_custom_call.1} parent=5 // pred_check_branch
        %1425 = sbr.rel (%p1423) target = $region76
      $region75: #{tpu_custom_call.1} parent=5 // pred_region
        %s1426 = ssub.s32 %s19, 2
        // Predicated region
        $region77: #{tpu_custom_call.1} parent=75 // pred_check
          %p1427 = pneg %p189
        $region78: #{tpu_custom_call.1} parent=75 // pred_check_branch
          %1429 = sbr.rel (%p1427) target = $region80
        $region79: #{tpu_custom_call.1} parent=75 // pred_region
          %s1430 = sand.u32 %s174, 1
          %s1431 = scalar_lea.sflag [#allocation6], %s1430
          %s1432 = sand.u32 %s174, 1
          %s1433 = smul.addr %s1432, 128
          %s1434 = scalar_lea.vmem [#allocation12], %s1433
          %1435 = dma.done %s1431, 2048
        $region80: #{tpu_custom_call.1} parent=75 // pred_fallthru
          _
      $region76: #{tpu_custom_call.1} parent=5 // pred_fallthru
        _
    $region6: #{tpu_custom_call.1} parent=1 // loop_footer
      %s23 = sadd.s32 1, %s19
    $region7: #{tpu_custom_call.1} parent=1 // loop_footer_branch
      %18 = sbr.rel target = $region3
    $region8: #{tpu_custom_call.1} parent=1 // loop_exit
      _
    %1436 = vsyncpa [#allocation5], 1
    %s1437 = scalar_lea.sflag [#allocation5], 1
    %1438 = vsyncpa %s1437, 1
    %1439 = vsyncpa [#allocation8], 1
    %1440 = vsyncpa [#allocation11], 1
    %1441 = vsyncpa [#allocation6], 1
    %s1442 = scalar_lea.sflag [#allocation6], 1
    %1443 = vsyncpa %s1442, 1

</llo_original>
